<compile_context>
chip_gen: v5e
topology: v5e:2x2
jax: 0.10.0
libtpu: 0.0.40
codegen_flags: <defaults>
</compile_context>

<pallas_src>
import functools

import jax
import jax.numpy as jnp
from jax.experimental import pallas as pl
from jax.experimental.pallas import tpu as pltpu


# ----------------------------- helpers -----------------------------

def _round_up(a, m):
    return -(-a // m) * m


def _vmem_budget():
    """Conservative per-kernel scoped-VMEM budget (v7x: 64 MiB physical vs 128 MiB elsewhere)."""
    try:
        cap = int(getattr(pltpu.get_tpu_info(), "vmem_capacity_bytes", 0)) or (64 << 20)
    except Exception:
        cap = 64 << 20
    return int(cap * 0.45)


def _pick_pixel_tile(hw, c_in, budget, want_multi):
    """Pixel tile for the stats pass: 128-aligned divisor of hw, block ~<= 1 MiB."""
    blk_budget = max(c_in * 4 * 128, min(budget // 8, 1 << 20))
    cap = max(128, blk_budget // (c_in * 4))
    cands = []
    if hw * c_in * 4 <= budget // 4:
        cands.append(hw)                                     # whole pixel axis in one tile
    top = (min(cap, hw) // 128) * 128
    cands += [t for t in range(top, 0, -128) if hw % t == 0 and t != hw]
    if not cands:
        raise NotImplementedError("H*W=%d has no 128-aligned tiling that fits VMEM" % hw)
    if want_multi:                                           # >=2 grid steps for v7x's 2 TCs
        for t in cands:
            if t < hw:
                return t
    return cands[0]


def _pick_row_tile(hp, c_out, k2, v2, budget, want_multi):
    """Row tile for pass 2, sized against padded block bytes + the resident folded weight."""
    k2p, v2p = _round_up(k2, 128), _round_up(v2, 128)
    w_bytes = 2 * c_out * k2p * v2p * 4                      # assume double-buffered
    if w_bytes > budget // 2:
        raise NotImplementedError("folded deconv weight too large for the VMEM budget")

    def fits(th):
        thp = _round_up(th, 8)
        return w_bytes + 2 * thp * 4 * (k2p + c_out * v2p) <= budget

    cands = [t for t in range(hp, 0, -1)
             if hp % t == 0 and (t % 8 == 0 or t == hp) and fits(t)]
    if not cands:
        raise NotImplementedError("no H tile fits the VMEM budget")
    if want_multi:
        for t in cands:
            if t < hp:
                return t
    return cands[0]


# ----------------------------- Pallas kernels -----------------------------

def _gram_stats_kernel(x_ref, g_ref, s_ref):
    """Exact x-moments for the BN statistics (Gram trick), accumulated per batch.

    x_ref: (1, C_in, TP) native-NCHW slice (pixels on lanes)
    g_ref: (1, C_in, C_in) resident accumulator of X @ X^T
    s_ref: (1, C_in, 1)    resident accumulator of rowsum(X)
    """
    @pl.when(pl.program_id(1) == 0)
    def _init():
        g_ref[...] = jnp.zeros_like(g_ref)
        s_ref[...] = jnp.zeros_like(s_ref)

    xa = x_ref[0]                                                     # (C_in, TP)
    g_ref[0] += jnp.dot(xa, xa.T, preferred_element_type=jnp.float32)  # MXU, K = TP
    s_ref[0] += jnp.sum(xa, axis=1, keepdims=True)                     # XLU


def _make_deconv_bn_relu_kernel(c_out):
    """Pass-2 kernel: channel-folded deconv matmul (BN scale folded into W) + shift + ReLU.

    x_ref:     (1, TH, K2)        rows = packed input image rows
    w_ref:     (C_out, K2, V2)    resident, upsample-folded + BN-scaled weights
    shift_ref: (C_out,) in SMEM   per-channel BN shift
    o_ref:     (1, C_out, TH, V2) NCHW-layout output rows
    """
    def kernel(x_ref, w_ref, shift_ref, o_ref):
        xt = x_ref[0]                                                 # (TH, K2)
        for c in range(c_out):                                        # static unroll
            y = jnp.dot(xt, w_ref[c], preferred_element_type=jnp.float32)
            o_ref[0, c] = jnp.maximum(y + shift_ref[c], 0.0)
    return kernel


def _make_fused_small_kernel(n_batch, c_out, eps, count):
    """Whole-op kernel for small problems: deconv + batch stats + BN + ReLU in one pass."""
    inv_count = 1.0 / count

    def _sum11(a):
        return jnp.sum(jnp.sum(a, axis=1, keepdims=True), axis=0, keepdims=True)

    def kernel(x_ref, w_ref, gamma_ref, beta_ref, o_ref):
        # x_ref: (N, Hp, K2); w_ref: (C_out, K2, V2); gamma/beta: (C_out,) SMEM
        # o_ref: (N, C_out, Hp, V2)
        for c in range(c_out):
            ys = [jnp.dot(x_ref[b], w_ref[c], preferred_element_type=jnp.float32)
                  for b in range(n_batch)]
            s = jnp.zeros((1, 1), jnp.float32)
            q = jnp.zeros((1, 1), jnp.float32)
            for y in ys:
                s = s + _sum11(y)
                q = q + _sum11(y * y)
            mean = s * inv_count
            var = jnp.maximum(q * inv_count - mean * mean, 0.0)
            scale = gamma_ref[c] * jax.lax.rsqrt(var + eps)
            shift = beta_ref[c] - scale * mean
            for b in range(n_batch):
                o_ref[b, c] = jnp.maximum(ys[b] * scale + shift, 0.0)
    return kernel


# ----------------------------- forward paths -----------------------------

def _fused_forward(xT2, wu_p, gamma, beta, eps, budget):
    N, Hp, K2 = xT2.shape
    C_out, _, V2 = wu_p.shape
    count = float(N * Hp * V2)                                        # = N * Ho * Wo
    kernel = _make_fused_small_kernel(N, C_out, float(eps), count)
    return pl.pallas_call(
        kernel,
        out_shape=jax.ShapeDtypeStruct((N, C_out, Hp, V2), jnp.float32),
        grid=(1,),
        in_specs=[
            pl.BlockSpec((N, Hp, K2), lambda i: (0, 0, 0)),
            pl.BlockSpec((C_out, K2, V2), lambda i: (0, 0, 0)),
            pl.BlockSpec(memory_space=pltpu.MemorySpace.SMEM),
            pl.BlockSpec(memory_space=pltpu.MemorySpace.SMEM),
        ],
        out_specs=pl.BlockSpec((N, C_out, Hp, V2), lambda i: (0, 0, 0, 0)),
        compiler_params=pltpu.CompilerParams(
            dimension_semantics=("arbitrary",),
            vmem_limit_bytes=budget),
    )(xT2, wu_p, gamma, beta)


def _two_pass_forward(x, weight, xT2, wu_p, gamma, beta, eps, budget):
    N, C_in, H, W = x.shape
    _, C_out, kH, kW = weight.shape
    _, K2, V2 = wu_p.shape
    Hp = xT2.shape[1]
    HW = H * W
    f32 = jnp.float32
    want_multi = (N == 1)

    # ---------------- pass 1: x moments (Gram trick), accumulated per batch ----------------
    x1 = x.reshape(N, C_in, HW)                                       # free reshape of NCHW
    TP = _pick_pixel_tile(HW, C_in, budget, want_multi)
    n_tp = HW // TP
    g, s = pl.pallas_call(
        _gram_stats_kernel,
        out_shape=(jax.ShapeDtypeStruct((N, C_in, C_in), f32),
                   jax.ShapeDtypeStruct((N, C_in, 1), f32)),
        grid=(N, n_tp),
        in_specs=[pl.BlockSpec((1, C_in, TP), lambda n, t: (n, 0, t))],
        out_specs=(pl.BlockSpec((1, C_in, C_in), lambda n, t: (n, 0, 0)),
                   pl.BlockSpec((1, C_in, 1), lambda n, t: (n, 0, 0))),
        compiler_params=pltpu.CompilerParams(
            dimension_semantics=("parallel", "arbitrary"),
            vmem_limit_bytes=budget),
    )(x1)

    # ---------------- exact per-channel BN statistics from the x moments (tiny XLA) ----------------
    G = jnp.sum(g, axis=0)                                            # (C_in, C_in)
    sx = jnp.sum(s, axis=0)[:, 0]                                     # (C_in,)
    R = C_out * kH * kW
    w2 = jnp.transpose(weight, (1, 2, 3, 0)).reshape(R, C_in)         # rows ordered (co, a, b)
    sum_r = w2 @ sx                                                   # sum_p y_r[p]
    sq_r = jnp.einsum('ri,ij,rj->r', w2, G, w2)                       # sum_p y_r[p]^2
    csum = sum_r.reshape(C_out, kH * kW).sum(axis=1)
    csq = sq_r.reshape(C_out, kH * kW).sum(axis=1)
    count = jnp.asarray(N * kH * kW * HW, f32)                        # = N * Ho * Wo
    mean_y = csum / count
    var = jnp.maximum(csq / count - mean_y * mean_y, 0.0)             # biased var; clamp
    # TODO(synk): centered accumulation if |mean| >> std ever matters for training use.
    scale = gamma * jax.lax.rsqrt(var + eps)
    shift = beta - scale * mean_y                                     # conv bias cancels exactly

    # ---------------- pass 2: channel-folded deconv matmul + BN affine + ReLU ----------------
    wu_s = wu_p * scale[:, None, None]                                # fold BN scale into W
    TH = _pick_row_tile(Hp, C_out, K2, V2, budget, want_multi)
    n_th = Hp // TH
    kernel = _make_deconv_bn_relu_kernel(C_out)
    out_big = pl.pallas_call(
        kernel,
        out_shape=jax.ShapeDtypeStruct((N, C_out, Hp, V2), f32),
        grid=(N, n_th),
        in_specs=[
            pl.BlockSpec((1, TH, K2), lambda n, h: (n, h, 0)),
            pl.BlockSpec((C_out, K2, V2), lambda n, h: (0, 0, 0)),    # resident weights
            pl.BlockSpec(memory_space=pltpu.MemorySpace.SMEM),        # per-channel shift
        ],
        out_specs=pl.BlockSpec((1, C_out, TH, V2), lambda n, h: (n, 0, h, 0)),
        compiler_params=pltpu.CompilerParams(
            dimension_semantics=("parallel", "parallel"),
            vmem_limit_bytes=budget),
    )(xT2, wu_s, shift)
    return out_big


# ----------------------------- wrapper -----------------------------

def conv_transpose_bn_relu(x, weight, bias, gamma, beta, eps=1e-5, force_two_pass=False):
    """x: (N, C_in, H, W); weight: (C_in, C_out, kH, kW) as in nn.ConvTranspose2d (k=2, s=2, p=0)."""
    N, C_in, H, W = x.shape
    C_in_w, C_out, kH, kW = weight.shape
    assert C_in == C_in_w and (kH, kW) == (2, 2), "kernel assumes kernel_size=2, stride=2, padding=0"

    f32 = jnp.float32
    x = x.astype(f32)
    weight = weight.astype(f32)
    gamma = gamma.astype(f32)
    beta = beta.astype(f32)
    del bias  # cancels exactly under training-mode BatchNorm (shifts y and the batch mean alike)

    Wo, Ho = kW * W, kH * H
    V = kH * Wo                              # 4*W lanes per output row group
    K = C_in * W

    # Row packing: put P image rows per matmul row so the store lane width is P*V (>=128 if possible);
    # consecutive rows are contiguous in NCHW, so the final reshape stays a free bitcast.
    P = 1
    while V * P < 128 and H % (2 * P) == 0:
        P *= 2
    Hp, K2, V2 = H // P, P * K, P * V

    # Small re-layout of x enabling zero-copy NCHW output (~C_in/(4*C_out) of the output bytes).
    xT2 = jnp.transpose(x, (0, 2, 1, 3)).reshape(N, H, K).reshape(N, Hp, K2)

    # Upsample-folded weight: wu[co, ci*W + w, a*2W + 2w + b] = weight[ci, co, a, b]; then block-diag
    # replicate P times so P packed rows are produced by one matmul.
    tgt = (jnp.arange(kH)[:, None, None] * Wo
           + jnp.arange(W)[None, :, None] * kW
           + jnp.arange(kW)[None, None, :])                           # (kH, W, kW)
    onehot = (tgt[..., None] == jnp.arange(V)).astype(f32)            # (kH, W, kW, V)
    wu = jnp.einsum('ioab,awbv->oiwv', weight, onehot).reshape(C_out, K, V)
    wu_p = jnp.einsum('pq,okv->opkqv', jnp.eye(P, dtype=f32), wu).reshape(C_out, K2, V2)

    budget = _vmem_budget()
    fused_bytes = 4 * (xT2.size + wu_p.size + N * C_out * Hp * V2)
    use_fused = (not force_two_pass) and fused_bytes <= min(budget, 8 << 20) and N * C_out <= 64

    if use_fused:
        out_big = _fused_forward(xT2, wu_p, gamma, beta, eps, budget)
    else:
        out_big = _two_pass_forward(x, weight, xT2, wu_p, gamma, beta, eps, budget)

    # (N, C_out, Hp, P*V) shares the NCHW row-major layout of (N, C_out, 2H, 2W): free reshape.
    return out_big.reshape(N, C_out, Ho, Wo)


# ----------------------------- pure-JAX reference -----------------------------

def reference(x, weight, bias, gamma, beta, eps=1e-5):
    N, C_in, H, W = x.shape
    _, C_out, kH, kW = weight.shape
    y = jnp.einsum('nchw,coab->nohawb', x, weight)
    y = y.reshape(N, C_out, H * kH, W * kW) + bias.reshape(1, C_out, 1, 1)
    mean = y.mean(axis=(0, 2, 3), keepdims=True)
    var = y.var(axis=(0, 2, 3), keepdims=True)
    yn = (y - mean) * jax.lax.rsqrt(var + eps)
    yn = yn * gamma.reshape(1, C_out, 1, 1) + beta.reshape(1, C_out, 1, 1)
    return jnp.maximum(yn, 0.0)


if __name__ == "__main__":
    N, C_in, C_out, H, W = 2, 4, 8, 16, 16

    key = jax.random.PRNGKey(0)
    kx, kw, kb, kg, kbt = jax.random.split(key, 5)
    x = jax.random.normal(kx, (N, C_in, H, W), dtype=jnp.float32)
    weight = 0.1 * jax.random.normal(kw, (C_in, C_out, 2, 2), dtype=jnp.float32)
    bias = 0.1 * jax.random.normal(kb, (C_out,), dtype=jnp.float32)
    gamma = jax.random.uniform(kg, (C_out,), jnp.float32, 0.5, 1.5)
    beta = 0.1 * jax.random.normal(kbt, (C_out,), dtype=jnp.float32)

    ref = reference(x, weight, bias, gamma, beta)

    # Fused single-kernel path (auto-selected at this size).
    fn_fused = jax.jit(conv_transpose_bn_relu)
    out_fused = jax.block_until_ready(fn_fused(x, weight, bias, gamma, beta))
    assert out_fused.shape == (N, C_out, 2 * H, 2 * W), out_fused.shape
    err_fused = float(jnp.abs(out_fused - ref).max())
    assert jnp.allclose(out_fused, ref, rtol=1e-4, atol=1e-4), err_fused

    # General two-pass path (Gram-trick stats + channel-folded deconv), validated too.
    fn_two = jax.jit(functools.partial(conv_transpose_bn_relu, force_two_pass=True))
    out_two = jax.block_until_ready(fn_two(x, weight, bias, gamma, beta))
    err_two = float(jnp.abs(out_two - ref).max())
    assert jnp.allclose(out_two, ref, rtol=1e-4, atol=1e-4), err_two

    print("KERNEL_OK")
</pallas_src>

<mosaic_0001>
module attributes {stable_mosaic.version = 11 : i64} {
  func.func @kernel(%arg0: i32, %arg1: memref<2x8x128xf32, #tpu.memory_space<vmem>>, %arg2: memref<8x128x128xf32, #tpu.memory_space<vmem>>, %arg3: memref<8xf32, #tpu.memory_space<smem>>, %arg4: memref<8xf32, #tpu.memory_space<smem>>, %arg5: memref<2x8x8x128xf32, #tpu.memory_space<vmem>>) attributes {dimension_semantics = [#tpu.dimension_semantics<arbitrary>], iteration_bounds = array<i64: 1>, scalar_prefetch = 0 : i64, scratch_operands = 0 : i64, tpu.core_type = #tpu.core_type<tc>, window_params = [{pipeline_mode = #tpu.pipeline_mode<synchronous>, transform_indices = @transform_0, window_bounds = array<i64: 2, 8, 128>}, {pipeline_mode = #tpu.pipeline_mode<synchronous>, transform_indices = @transform_1, window_bounds = array<i64: 8, 128, 128>}, {transform_indices = @transform_2, window_bounds = array<i64: 8>}, {transform_indices = @transform_3, window_bounds = array<i64: 8>}, {pipeline_mode = #tpu.pipeline_mode<synchronous>, transform_indices = @transform_4, window_bounds = array<i64: 2, 8, 8, 128>}]} {
    %c0 = arith.constant 0 : index
    %c0_0 = arith.constant 0 : index
    %c0_1 = arith.constant 0 : index
    %0 = vector.load %arg1[%c0, %c0_0, %c0_1] : memref<2x8x128xf32, #tpu.memory_space<vmem>>, vector<1x8x128xf32>
    %1 = vector.shape_cast %0 : vector<1x8x128xf32> to vector<8x128xf32>
    %c0_2 = arith.constant 0 : index
    %c0_3 = arith.constant 0 : index
    %c0_4 = arith.constant 0 : index
    %2 = vector.load %arg2[%c0_2, %c0_3, %c0_4] : memref<8x128x128xf32, #tpu.memory_space<vmem>>, vector<1x128x128xf32>
    %3 = vector.shape_cast %2 : vector<1x128x128xf32> to vector<128x128xf32>
    %cst = arith.constant dense<0.000000e+00> : vector<8x128xf32>
    %4 = tpu.matmul %1, %3, %cst {dimension_numbers = #tpu.dot_dimension_numbers<[1], [0], [0], [1], [0, 0, 1, 1], [], []>} : vector<8x128xf32>, vector<128x128xf32>, vector<8x128xf32> -> vector<8x128xf32>
    %c1 = arith.constant 1 : index
    %c0_5 = arith.constant 0 : index
    %c0_6 = arith.constant 0 : index
    %5 = vector.load %arg1[%c1, %c0_5, %c0_6] : memref<2x8x128xf32, #tpu.memory_space<vmem>>, vector<1x8x128xf32>
    %6 = vector.shape_cast %5 : vector<1x8x128xf32> to vector<8x128xf32>
    %c0_7 = arith.constant 0 : index
    %c0_8 = arith.constant 0 : index
    %c0_9 = arith.constant 0 : index
    %7 = vector.load %arg2[%c0_7, %c0_8, %c0_9] : memref<8x128x128xf32, #tpu.memory_space<vmem>>, vector<1x128x128xf32>
    %8 = vector.shape_cast %7 : vector<1x128x128xf32> to vector<128x128xf32>
    %cst_10 = arith.constant dense<0.000000e+00> : vector<8x128xf32>
    %9 = tpu.matmul %6, %8, %cst_10 {dimension_numbers = #tpu.dot_dimension_numbers<[1], [0], [0], [1], [0, 0, 1, 1], [], []>} : vector<8x128xf32>, vector<128x128xf32>, vector<8x128xf32> -> vector<8x128xf32>
    %cst_11 = arith.constant 0.000000e+00 : f32
    %10 = vector.broadcast %cst_11 : f32 to vector<1x1xf32>
    %cst_12 = arith.constant 0.000000e+00 : f32
    %11 = vector.broadcast %cst_12 : f32 to vector<1x1xf32>
    %cst_13 = arith.constant dense<0.000000e+00> : vector<8xf32>
    %12 = vector.multi_reduction <add>, %4, %cst_13 [1] : vector<8x128xf32> to vector<8xf32>
    %13 = vector.shape_cast %12 : vector<8xf32> to vector<8x1xf32>
    %cst_14 = arith.constant dense<0.000000e+00> : vector<1xf32>
    %14 = vector.multi_reduction <add>, %13, %cst_14 [0] : vector<8x1xf32> to vector<1xf32>
    %15 = vector.shape_cast %14 : vector<1xf32> to vector<1x1xf32>
    %16 = arith.addf %10, %15 : vector<1x1xf32>
    %17 = arith.mulf %4, %4 : vector<8x128xf32>
    %cst_15 = arith.constant dense<0.000000e+00> : vector<8xf32>
    %18 = vector.multi_reduction <add>, %17, %cst_15 [1] : vector<8x128xf32> to vector<8xf32>
    %19 = vector.shape_cast %18 : vector<8xf32> to vector<8x1xf32>
    %cst_16 = arith.constant dense<0.000000e+00> : vector<1xf32>
    %20 = vector.multi_reduction <add>, %19, %cst_16 [0] : vector<8x1xf32> to vector<1xf32>
    %21 = vector.shape_cast %20 : vector<1xf32> to vector<1x1xf32>
    %22 = arith.addf %11, %21 : vector<1x1xf32>
    %cst_17 = arith.constant dense<0.000000e+00> : vector<8xf32>
    %23 = vector.multi_reduction <add>, %9, %cst_17 [1] : vector<8x128xf32> to vector<8xf32>
    %24 = vector.shape_cast %23 : vector<8xf32> to vector<8x1xf32>
    %cst_18 = arith.constant dense<0.000000e+00> : vector<1xf32>
    %25 = vector.multi_reduction <add>, %24, %cst_18 [0] : vector<8x1xf32> to vector<1xf32>
    %26 = vector.shape_cast %25 : vector<1xf32> to vector<1x1xf32>
    %27 = arith.addf %16, %26 : vector<1x1xf32>
    %28 = arith.mulf %9, %9 : vector<8x128xf32>
    %cst_19 = arith.constant dense<0.000000e+00> : vector<8xf32>
    %29 = vector.multi_reduction <add>, %28, %cst_19 [1] : vector<8x128xf32> to vector<8xf32>
    %30 = vector.shape_cast %29 : vector<8xf32> to vector<8x1xf32>
    %cst_20 = arith.constant dense<0.000000e+00> : vector<1xf32>
    %31 = vector.multi_reduction <add>, %30, %cst_20 [0] : vector<8x1xf32> to vector<1xf32>
    %32 = vector.shape_cast %31 : vector<1xf32> to vector<1x1xf32>
    %33 = arith.addf %22, %32 : vector<1x1xf32>
    %cst_21 = arith.constant 4.8828125E-4 : f32
    %34 = vector.broadcast %cst_21 : f32 to vector<1x1xf32>
    %35 = arith.mulf %27, %34 : vector<1x1xf32>
    %cst_22 = arith.constant 4.8828125E-4 : f32
    %36 = vector.broadcast %cst_22 : f32 to vector<1x1xf32>
    %37 = arith.mulf %33, %36 : vector<1x1xf32>
    %38 = arith.mulf %35, %35 : vector<1x1xf32>
    %39 = arith.subf %37, %38 : vector<1x1xf32>
    %cst_23 = arith.constant 0.000000e+00 : f32
    %40 = vector.broadcast %cst_23 : f32 to vector<1x1xf32>
    %41 = arith.maximumf %39, %40 : vector<1x1xf32>
    %c0_24 = arith.constant 0 : index
    %42 = memref.load %arg3[%c0_24] : memref<8xf32, #tpu.memory_space<smem>>
    %cst_25 = arith.constant 9.99999974E-6 : f32
    %43 = vector.broadcast %cst_25 : f32 to vector<1x1xf32>
    %44 = arith.addf %41, %43 : vector<1x1xf32>
    %45 = math.rsqrt %44 : vector<1x1xf32>
    %46 = vector.broadcast %42 : f32 to vector<1x1xf32>
    %47 = arith.mulf %46, %45 : vector<1x1xf32>
    %c0_26 = arith.constant 0 : index
    %48 = memref.load %arg4[%c0_26] : memref<8xf32, #tpu.memory_space<smem>>
    %49 = arith.mulf %47, %35 : vector<1x1xf32>
    %50 = vector.broadcast %48 : f32 to vector<1x1xf32>
    %51 = arith.subf %50, %49 : vector<1x1xf32>
    %52 = vector.broadcast %47 : vector<1x1xf32> to vector<8x128xf32>
    %53 = arith.mulf %4, %52 : vector<8x128xf32>
    %54 = vector.broadcast %51 : vector<1x1xf32> to vector<8x128xf32>
    %55 = arith.addf %53, %54 : vector<8x128xf32>
    %cst_27 = arith.constant 0.000000e+00 : f32
    %56 = vector.broadcast %cst_27 : f32 to vector<8x128xf32>
    %57 = arith.maximumf %55, %56 : vector<8x128xf32>
    %c0_28 = arith.constant 0 : index
    %c0_29 = arith.constant 0 : index
    %c0_30 = arith.constant 0 : index
    %c0_31 = arith.constant 0 : index
    %58 = vector.load %arg5[%c0_28, %c0_29, %c0_30, %c0_31] : memref<2x8x8x128xf32, #tpu.memory_space<vmem>>, vector<1x1x8x128xf32>
    %59 = vector.shape_cast %58 : vector<1x1x8x128xf32> to vector<8x128xf32>
    %60 = vector.shape_cast %57 : vector<8x128xf32> to vector<1x1x8x128xf32>
    tpu.vector_store %arg5[%c0_28, %c0_29, %c0_30, %c0_31], %60 {strides = array<i32>} : memref<2x8x8x128xf32, #tpu.memory_space<vmem>>, vector<1x1x8x128xf32>,
    %61 = vector.broadcast %47 : vector<1x1xf32> to vector<8x128xf32>
    %62 = arith.mulf %9, %61 : vector<8x128xf32>
    %63 = vector.broadcast %51 : vector<1x1xf32> to vector<8x128xf32>
    %64 = arith.addf %62, %63 : vector<8x128xf32>
    %cst_32 = arith.constant 0.000000e+00 : f32
    %65 = vector.broadcast %cst_32 : f32 to vector<8x128xf32>
    %66 = arith.maximumf %64, %65 : vector<8x128xf32>
    %c1_33 = arith.constant 1 : index
    %c0_34 = arith.constant 0 : index
    %c0_35 = arith.constant 0 : index
    %c0_36 = arith.constant 0 : index
    %67 = vector.load %arg5[%c1_33, %c0_34, %c0_35, %c0_36] : memref<2x8x8x128xf32, #tpu.memory_space<vmem>>, vector<1x1x8x128xf32>
    %68 = vector.shape_cast %67 : vector<1x1x8x128xf32> to vector<8x128xf32>
    %69 = vector.shape_cast %66 : vector<8x128xf32> to vector<1x1x8x128xf32>
    tpu.vector_store %arg5[%c1_33, %c0_34, %c0_35, %c0_36], %69 {strides = array<i32>} : memref<2x8x8x128xf32, #tpu.memory_space<vmem>>, vector<1x1x8x128xf32>,
    %c0_37 = arith.constant 0 : index
    %c0_38 = arith.constant 0 : index
    %c0_39 = arith.constant 0 : index
    %70 = vector.load %arg1[%c0_37, %c0_38, %c0_39] : memref<2x8x128xf32, #tpu.memory_space<vmem>>, vector<1x8x128xf32>
    %71 = vector.shape_cast %70 : vector<1x8x128xf32> to vector<8x128xf32>
    %c1_40 = arith.constant 1 : index
    %c0_41 = arith.constant 0 : index
    %c0_42 = arith.constant 0 : index
    %72 = vector.load %arg2[%c1_40, %c0_41, %c0_42] : memref<8x128x128xf32, #tpu.memory_space<vmem>>, vector<1x128x128xf32>
    %73 = vector.shape_cast %72 : vector<1x128x128xf32> to vector<128x128xf32>
    %cst_43 = arith.constant dense<0.000000e+00> : vector<8x128xf32>
    %74 = tpu.matmul %71, %73, %cst_43 {dimension_numbers = #tpu.dot_dimension_numbers<[1], [0], [0], [1], [0, 0, 1, 1], [], []>} : vector<8x128xf32>, vector<128x128xf32>, vector<8x128xf32> -> vector<8x128xf32>
    %c1_44 = arith.constant 1 : index
    %c0_45 = arith.constant 0 : index
    %c0_46 = arith.constant 0 : index
    %75 = vector.load %arg1[%c1_44, %c0_45, %c0_46] : memref<2x8x128xf32, #tpu.memory_space<vmem>>, vector<1x8x128xf32>
    %76 = vector.shape_cast %75 : vector<1x8x128xf32> to vector<8x128xf32>
    %c1_47 = arith.constant 1 : index
    %c0_48 = arith.constant 0 : index
    %c0_49 = arith.constant 0 : index
    %77 = vector.load %arg2[%c1_47, %c0_48, %c0_49] : memref<8x128x128xf32, #tpu.memory_space<vmem>>, vector<1x128x128xf32>
    %78 = vector.shape_cast %77 : vector<1x128x128xf32> to vector<128x128xf32>
    %cst_50 = arith.constant dense<0.000000e+00> : vector<8x128xf32>
    %79 = tpu.matmul %76, %78, %cst_50 {dimension_numbers = #tpu.dot_dimension_numbers<[1], [0], [0], [1], [0, 0, 1, 1], [], []>} : vector<8x128xf32>, vector<128x128xf32>, vector<8x128xf32> -> vector<8x128xf32>
    %cst_51 = arith.constant 0.000000e+00 : f32
    %80 = vector.broadcast %cst_51 : f32 to vector<1x1xf32>
    %cst_52 = arith.constant 0.000000e+00 : f32
    %81 = vector.broadcast %cst_52 : f32 to vector<1x1xf32>
    %cst_53 = arith.constant dense<0.000000e+00> : vector<8xf32>
    %82 = vector.multi_reduction <add>, %74, %cst_53 [1] : vector<8x128xf32> to vector<8xf32>
    %83 = vector.shape_cast %82 : vector<8xf32> to vector<8x1xf32>
    %cst_54 = arith.constant dense<0.000000e+00> : vector<1xf32>
    %84 = vector.multi_reduction <add>, %83, %cst_54 [0] : vector<8x1xf32> to vector<1xf32>
    %85 = vector.shape_cast %84 : vector<1xf32> to vector<1x1xf32>
    %86 = arith.addf %80, %85 : vector<1x1xf32>
    %87 = arith.mulf %74, %74 : vector<8x128xf32>
    %cst_55 = arith.constant dense<0.000000e+00> : vector<8xf32>
    %88 = vector.multi_reduction <add>, %87, %cst_55 [1] : vector<8x128xf32> to vector<8xf32>
    %89 = vector.shape_cast %88 : vector<8xf32> to vector<8x1xf32>
    %cst_56 = arith.constant dense<0.000000e+00> : vector<1xf32>
    %90 = vector.multi_reduction <add>, %89, %cst_56 [0] : vector<8x1xf32> to vector<1xf32>
    %91 = vector.shape_cast %90 : vector<1xf32> to vector<1x1xf32>
    %92 = arith.addf %81, %91 : vector<1x1xf32>
    %cst_57 = arith.constant dense<0.000000e+00> : vector<8xf32>
    %93 = vector.multi_reduction <add>, %79, %cst_57 [1] : vector<8x128xf32> to vector<8xf32>
    %94 = vector.shape_cast %93 : vector<8xf32> to vector<8x1xf32>
    %cst_58 = arith.constant dense<0.000000e+00> : vector<1xf32>
    %95 = vector.multi_reduction <add>, %94, %cst_58 [0] : vector<8x1xf32> to vector<1xf32>
    %96 = vector.shape_cast %95 : vector<1xf32> to vector<1x1xf32>
    %97 = arith.addf %86, %96 : vector<1x1xf32>
    %98 = arith.mulf %79, %79 : vector<8x128xf32>
    %cst_59 = arith.constant dense<0.000000e+00> : vector<8xf32>
    %99 = vector.multi_reduction <add>, %98, %cst_59 [1] : vector<8x128xf32> to vector<8xf32>
    %100 = vector.shape_cast %99 : vector<8xf32> to vector<8x1xf32>
    %cst_60 = arith.constant dense<0.000000e+00> : vector<1xf32>
    %101 = vector.multi_reduction <add>, %100, %cst_60 [0] : vector<8x1xf32> to vector<1xf32>
    %102 = vector.shape_cast %101 : vector<1xf32> to vector<1x1xf32>
    %103 = arith.addf %92, %102 : vector<1x1xf32>
    %cst_61 = arith.constant 4.8828125E-4 : f32
    %104 = vector.broadcast %cst_61 : f32 to vector<1x1xf32>
    %105 = arith.mulf %97, %104 : vector<1x1xf32>
    %cst_62 = arith.constant 4.8828125E-4 : f32
    %106 = vector.broadcast %cst_62 : f32 to vector<1x1xf32>
    %107 = arith.mulf %103, %106 : vector<1x1xf32>
    %108 = arith.mulf %105, %105 : vector<1x1xf32>
    %109 = arith.subf %107, %108 : vector<1x1xf32>
    %cst_63 = arith.constant 0.000000e+00 : f32
    %110 = vector.broadcast %cst_63 : f32 to vector<1x1xf32>
    %111 = arith.maximumf %109, %110 : vector<1x1xf32>
    %c1_64 = arith.constant 1 : index
    %112 = memref.load %arg3[%c1_64] : memref<8xf32, #tpu.memory_space<smem>>
    %cst_65 = arith.constant 9.99999974E-6 : f32
    %113 = vector.broadcast %cst_65 : f32 to vector<1x1xf32>
    %114 = arith.addf %111, %113 : vector<1x1xf32>
    %115 = math.rsqrt %114 : vector<1x1xf32>
    %116 = vector.broadcast %112 : f32 to vector<1x1xf32>
    %117 = arith.mulf %116, %115 : vector<1x1xf32>
    %c1_66 = arith.constant 1 : index
    %118 = memref.load %arg4[%c1_66] : memref<8xf32, #tpu.memory_space<smem>>
    %119 = arith.mulf %117, %105 : vector<1x1xf32>
    %120 = vector.broadcast %118 : f32 to vector<1x1xf32>
    %121 = arith.subf %120, %119 : vector<1x1xf32>
    %122 = vector.broadcast %117 : vector<1x1xf32> to vector<8x128xf32>
    %123 = arith.mulf %74, %122 : vector<8x128xf32>
    %124 = vector.broadcast %121 : vector<1x1xf32> to vector<8x128xf32>
    %125 = arith.addf %123, %124 : vector<8x128xf32>
    %cst_67 = arith.constant 0.000000e+00 : f32
    %126 = vector.broadcast %cst_67 : f32 to vector<8x128xf32>
    %127 = arith.maximumf %125, %126 : vector<8x128xf32>
    %c0_68 = arith.constant 0 : index
    %c1_69 = arith.constant 1 : index
    %c0_70 = arith.constant 0 : index
    %c0_71 = arith.constant 0 : index
    %128 = vector.load %arg5[%c0_68, %c1_69, %c0_70, %c0_71] : memref<2x8x8x128xf32, #tpu.memory_space<vmem>>, vector<1x1x8x128xf32>
    %129 = vector.shape_cast %128 : vector<1x1x8x128xf32> to vector<8x128xf32>
    %130 = vector.shape_cast %127 : vector<8x128xf32> to vector<1x1x8x128xf32>
    tpu.vector_store %arg5[%c0_68, %c1_69, %c0_70, %c0_71], %130 {strides = array<i32>} : memref<2x8x8x128xf32, #tpu.memory_space<vmem>>, vector<1x1x8x128xf32>,
    %131 = vector.broadcast %117 : vector<1x1xf32> to vector<8x128xf32>
    %132 = arith.mulf %79, %131 : vector<8x128xf32>
    %133 = vector.broadcast %121 : vector<1x1xf32> to vector<8x128xf32>
    %134 = arith.addf %132, %133 : vector<8x128xf32>
    %cst_72 = arith.constant 0.000000e+00 : f32
    %135 = vector.broadcast %cst_72 : f32 to vector<8x128xf32>
    %136 = arith.maximumf %134, %135 : vector<8x128xf32>
    %c1_73 = arith.constant 1 : index
    %c1_74 = arith.constant 1 : index
    %c0_75 = arith.constant 0 : index
    %c0_76 = arith.constant 0 : index
    %137 = vector.load %arg5[%c1_73, %c1_74, %c0_75, %c0_76] : memref<2x8x8x128xf32, #tpu.memory_space<vmem>>, vector<1x1x8x128xf32>
    %138 = vector.shape_cast %137 : vector<1x1x8x128xf32> to vector<8x128xf32>
    %139 = vector.shape_cast %136 : vector<8x128xf32> to vector<1x1x8x128xf32>
    tpu.vector_store %arg5[%c1_73, %c1_74, %c0_75, %c0_76], %139 {strides = array<i32>} : memref<2x8x8x128xf32, #tpu.memory_space<vmem>>, vector<1x1x8x128xf32>,
    %c0_77 = arith.constant 0 : index
    %c0_78 = arith.constant 0 : index
    %c0_79 = arith.constant 0 : index
    %140 = vector.load %arg1[%c0_77, %c0_78, %c0_79] : memref<2x8x128xf32, #tpu.memory_space<vmem>>, vector<1x8x128xf32>
    %141 = vector.shape_cast %140 : vector<1x8x128xf32> to vector<8x128xf32>
    %c2 = arith.constant 2 : index
    %c0_80 = arith.constant 0 : index
    %c0_81 = arith.constant 0 : index
    %142 = vector.load %arg2[%c2, %c0_80, %c0_81] : memref<8x128x128xf32, #tpu.memory_space<vmem>>, vector<1x128x128xf32>
    %143 = vector.shape_cast %142 : vector<1x128x128xf32> to vector<128x128xf32>
    %cst_82 = arith.constant dense<0.000000e+00> : vector<8x128xf32>
    %144 = tpu.matmul %141, %143, %cst_82 {dimension_numbers = #tpu.dot_dimension_numbers<[1], [0], [0], [1], [0, 0, 1, 1], [], []>} : vector<8x128xf32>, vector<128x128xf32>, vector<8x128xf32> -> vector<8x128xf32>
    %c1_83 = arith.constant 1 : index
    %c0_84 = arith.constant 0 : index
    %c0_85 = arith.constant 0 : index
    %145 = vector.load %arg1[%c1_83, %c0_84, %c0_85] : memref<2x8x128xf32, #tpu.memory_space<vmem>>, vector<1x8x128xf32>
    %146 = vector.shape_cast %145 : vector<1x8x128xf32> to vector<8x128xf32>
    %c2_86 = arith.constant 2 : index
    %c0_87 = arith.constant 0 : index
    %c0_88 = arith.constant 0 : index
    %147 = vector.load %arg2[%c2_86, %c0_87, %c0_88] : memref<8x128x128xf32, #tpu.memory_space<vmem>>, vector<1x128x128xf32>
    %148 = vector.shape_cast %147 : vector<1x128x128xf32> to vector<128x128xf32>
    %cst_89 = arith.constant dense<0.000000e+00> : vector<8x128xf32>
    %149 = tpu.matmul %146, %148, %cst_89 {dimension_numbers = #tpu.dot_dimension_numbers<[1], [0], [0], [1], [0, 0, 1, 1], [], []>} : vector<8x128xf32>, vector<128x128xf32>, vector<8x128xf32> -> vector<8x128xf32>
    %cst_90 = arith.constant 0.000000e+00 : f32
    %150 = vector.broadcast %cst_90 : f32 to vector<1x1xf32>
    %cst_91 = arith.constant 0.000000e+00 : f32
    %151 = vector.broadcast %cst_91 : f32 to vector<1x1xf32>
    %cst_92 = arith.constant dense<0.000000e+00> : vector<8xf32>
    %152 = vector.multi_reduction <add>, %144, %cst_92 [1] : vector<8x128xf32> to vector<8xf32>
    %153 = vector.shape_cast %152 : vector<8xf32> to vector<8x1xf32>
    %cst_93 = arith.constant dense<0.000000e+00> : vector<1xf32>
    %154 = vector.multi_reduction <add>, %153, %cst_93 [0] : vector<8x1xf32> to vector<1xf32>
    %155 = vector.shape_cast %154 : vector<1xf32> to vector<1x1xf32>
    %156 = arith.addf %150, %155 : vector<1x1xf32>
    %157 = arith.mulf %144, %144 : vector<8x128xf32>
    %cst_94 = arith.constant dense<0.000000e+00> : vector<8xf32>
    %158 = vector.multi_reduction <add>, %157, %cst_94 [1] : vector<8x128xf32> to vector<8xf32>
    %159 = vector.shape_cast %158 : vector<8xf32> to vector<8x1xf32>
    %cst_95 = arith.constant dense<0.000000e+00> : vector<1xf32>
    %160 = vector.multi_reduction <add>, %159, %cst_95 [0] : vector<8x1xf32> to vector<1xf32>
    %161 = vector.shape_cast %160 : vector<1xf32> to vector<1x1xf32>
    %162 = arith.addf %151, %161 : vector<1x1xf32>
    %cst_96 = arith.constant dense<0.000000e+00> : vector<8xf32>
    %163 = vector.multi_reduction <add>, %149, %cst_96 [1] : vector<8x128xf32> to vector<8xf32>
    %164 = vector.shape_cast %163 : vector<8xf32> to vector<8x1xf32>
    %cst_97 = arith.constant dense<0.000000e+00> : vector<1xf32>
    %165 = vector.multi_reduction <add>, %164, %cst_97 [0] : vector<8x1xf32> to vector<1xf32>
    %166 = vector.shape_cast %165 : vector<1xf32> to vector<1x1xf32>
    %167 = arith.addf %156, %166 : vector<1x1xf32>
    %168 = arith.mulf %149, %149 : vector<8x128xf32>
    %cst_98 = arith.constant dense<0.000000e+00> : vector<8xf32>
    %169 = vector.multi_reduction <add>, %168, %cst_98 [1] : vector<8x128xf32> to vector<8xf32>
    %170 = vector.shape_cast %169 : vector<8xf32> to vector<8x1xf32>
    %cst_99 = arith.constant dense<0.000000e+00> : vector<1xf32>
    %171 = vector.multi_reduction <add>, %170, %cst_99 [0] : vector<8x1xf32> to vector<1xf32>
    %172 = vector.shape_cast %171 : vector<1xf32> to vector<1x1xf32>
    %173 = arith.addf %162, %172 : vector<1x1xf32>
    %cst_100 = arith.constant 4.8828125E-4 : f32
    %174 = vector.broadcast %cst_100 : f32 to vector<1x1xf32>
    %175 = arith.mulf %167, %174 : vector<1x1xf32>
    %cst_101 = arith.constant 4.8828125E-4 : f32
    %176 = vector.broadcast %cst_101 : f32 to vector<1x1xf32>
    %177 = arith.mulf %173, %176 : vector<1x1xf32>
    %178 = arith.mulf %175, %175 : vector<1x1xf32>
    %179 = arith.subf %177, %178 : vector<1x1xf32>
    %cst_102 = arith.constant 0.000000e+00 : f32
    %180 = vector.broadcast %cst_102 : f32 to vector<1x1xf32>
    %181 = arith.maximumf %179, %180 : vector<1x1xf32>
    %c2_103 = arith.constant 2 : index
    %182 = memref.load %arg3[%c2_103] : memref<8xf32, #tpu.memory_space<smem>>
    %cst_104 = arith.constant 9.99999974E-6 : f32
    %183 = vector.broadcast %cst_104 : f32 to vector<1x1xf32>
    %184 = arith.addf %181, %183 : vector<1x1xf32>
    %185 = math.rsqrt %184 : vector<1x1xf32>
    %186 = vector.broadcast %182 : f32 to vector<1x1xf32>
    %187 = arith.mulf %186, %185 : vector<1x1xf32>
    %c2_105 = arith.constant 2 : index
    %188 = memref.load %arg4[%c2_105] : memref<8xf32, #tpu.memory_space<smem>>
    %189 = arith.mulf %187, %175 : vector<1x1xf32>
    %190 = vector.broadcast %188 : f32 to vector<1x1xf32>
    %191 = arith.subf %190, %189 : vector<1x1xf32>
    %192 = vector.broadcast %187 : vector<1x1xf32> to vector<8x128xf32>
    %193 = arith.mulf %144, %192 : vector<8x128xf32>
    %194 = vector.broadcast %191 : vector<1x1xf32> to vector<8x128xf32>
    %195 = arith.addf %193, %194 : vector<8x128xf32>
    %cst_106 = arith.constant 0.000000e+00 : f32
    %196 = vector.broadcast %cst_106 : f32 to vector<8x128xf32>
    %197 = arith.maximumf %195, %196 : vector<8x128xf32>
    %c0_107 = arith.constant 0 : index
    %c2_108 = arith.constant 2 : index
    %c0_109 = arith.constant 0 : index
    %c0_110 = arith.constant 0 : index
    %198 = vector.load %arg5[%c0_107, %c2_108, %c0_109, %c0_110] : memref<2x8x8x128xf32, #tpu.memory_space<vmem>>, vector<1x1x8x128xf32>
    %199 = vector.shape_cast %198 : vector<1x1x8x128xf32> to vector<8x128xf32>
    %200 = vector.shape_cast %197 : vector<8x128xf32> to vector<1x1x8x128xf32>
    tpu.vector_store %arg5[%c0_107, %c2_108, %c0_109, %c0_110], %200 {strides = array<i32>} : memref<2x8x8x128xf32, #tpu.memory_space<vmem>>, vector<1x1x8x128xf32>,
    %201 = vector.broadcast %187 : vector<1x1xf32> to vector<8x128xf32>
    %202 = arith.mulf %149, %201 : vector<8x128xf32>
    %203 = vector.broadcast %191 : vector<1x1xf32> to vector<8x128xf32>
    %204 = arith.addf %202, %203 : vector<8x128xf32>
    %cst_111 = arith.constant 0.000000e+00 : f32
    %205 = vector.broadcast %cst_111 : f32 to vector<8x128xf32>
    %206 = arith.maximumf %204, %205 : vector<8x128xf32>
    %c1_112 = arith.constant 1 : index
    %c2_113 = arith.constant 2 : index
    %c0_114 = arith.constant 0 : index
    %c0_115 = arith.constant 0 : index
    %207 = vector.load %arg5[%c1_112, %c2_113, %c0_114, %c0_115] : memref<2x8x8x128xf32, #tpu.memory_space<vmem>>, vector<1x1x8x128xf32>
    %208 = vector.shape_cast %207 : vector<1x1x8x128xf32> to vector<8x128xf32>
    %209 = vector.shape_cast %206 : vector<8x128xf32> to vector<1x1x8x128xf32>
    tpu.vector_store %arg5[%c1_112, %c2_113, %c0_114, %c0_115], %209 {strides = array<i32>} : memref<2x8x8x128xf32, #tpu.memory_space<vmem>>, vector<1x1x8x128xf32>,
    %c0_116 = arith.constant 0 : index
    %c0_117 = arith.constant 0 : index
    %c0_118 = arith.constant 0 : index
    %210 = vector.load %arg1[%c0_116, %c0_117, %c0_118] : memref<2x8x128xf32, #tpu.memory_space<vmem>>, vector<1x8x128xf32>
    %211 = vector.shape_cast %210 : vector<1x8x128xf32> to vector<8x128xf32>
    %c3 = arith.constant 3 : index
    %c0_119 = arith.constant 0 : index
    %c0_120 = arith.constant 0 : index
    %212 = vector.load %arg2[%c3, %c0_119, %c0_120] : memref<8x128x128xf32, #tpu.memory_space<vmem>>, vector<1x128x128xf32>
    %213 = vector.shape_cast %212 : vector<1x128x128xf32> to vector<128x128xf32>
    %cst_121 = arith.constant dense<0.000000e+00> : vector<8x128xf32>
    %214 = tpu.matmul %211, %213, %cst_121 {dimension_numbers = #tpu.dot_dimension_numbers<[1], [0], [0], [1], [0, 0, 1, 1], [], []>} : vector<8x128xf32>, vector<128x128xf32>, vector<8x128xf32> -> vector<8x128xf32>
    %c1_122 = arith.constant 1 : index
    %c0_123 = arith.constant 0 : index
    %c0_124 = arith.constant 0 : index
    %215 = vector.load %arg1[%c1_122, %c0_123, %c0_124] : memref<2x8x128xf32, #tpu.memory_space<vmem>>, vector<1x8x128xf32>
    %216 = vector.shape_cast %215 : vector<1x8x128xf32> to vector<8x128xf32>
    %c3_125 = arith.constant 3 : index
    %c0_126 = arith.constant 0 : index
    %c0_127 = arith.constant 0 : index
    %217 = vector.load %arg2[%c3_125, %c0_126, %c0_127] : memref<8x128x128xf32, #tpu.memory_space<vmem>>, vector<1x128x128xf32>
    %218 = vector.shape_cast %217 : vector<1x128x128xf32> to vector<128x128xf32>
    %cst_128 = arith.constant dense<0.000000e+00> : vector<8x128xf32>
    %219 = tpu.matmul %216, %218, %cst_128 {dimension_numbers = #tpu.dot_dimension_numbers<[1], [0], [0], [1], [0, 0, 1, 1], [], []>} : vector<8x128xf32>, vector<128x128xf32>, vector<8x128xf32> -> vector<8x128xf32>
    %cst_129 = arith.constant 0.000000e+00 : f32
    %220 = vector.broadcast %cst_129 : f32 to vector<1x1xf32>
    %cst_130 = arith.constant 0.000000e+00 : f32
    %221 = vector.broadcast %cst_130 : f32 to vector<1x1xf32>
    %cst_131 = arith.constant dense<0.000000e+00> : vector<8xf32>
    %222 = vector.multi_reduction <add>, %214, %cst_131 [1] : vector<8x128xf32> to vector<8xf32>
    %223 = vector.shape_cast %222 : vector<8xf32> to vector<8x1xf32>
    %cst_132 = arith.constant dense<0.000000e+00> : vector<1xf32>
    %224 = vector.multi_reduction <add>, %223, %cst_132 [0] : vector<8x1xf32> to vector<1xf32>
    %225 = vector.shape_cast %224 : vector<1xf32> to vector<1x1xf32>
    %226 = arith.addf %220, %225 : vector<1x1xf32>
    %227 = arith.mulf %214, %214 : vector<8x128xf32>
    %cst_133 = arith.constant dense<0.000000e+00> : vector<8xf32>
    %228 = vector.multi_reduction <add>, %227, %cst_133 [1] : vector<8x128xf32> to vector<8xf32>
    %229 = vector.shape_cast %228 : vector<8xf32> to vector<8x1xf32>
    %cst_134 = arith.constant dense<0.000000e+00> : vector<1xf32>
    %230 = vector.multi_reduction <add>, %229, %cst_134 [0] : vector<8x1xf32> to vector<1xf32>
    %231 = vector.shape_cast %230 : vector<1xf32> to vector<1x1xf32>
    %232 = arith.addf %221, %231 : vector<1x1xf32>
    %cst_135 = arith.constant dense<0.000000e+00> : vector<8xf32>
    %233 = vector.multi_reduction <add>, %219, %cst_135 [1] : vector<8x128xf32> to vector<8xf32>
    %234 = vector.shape_cast %233 : vector<8xf32> to vector<8x1xf32>
    %cst_136 = arith.constant dense<0.000000e+00> : vector<1xf32>
    %235 = vector.multi_reduction <add>, %234, %cst_136 [0] : vector<8x1xf32> to vector<1xf32>
    %236 = vector.shape_cast %235 : vector<1xf32> to vector<1x1xf32>
    %237 = arith.addf %226, %236 : vector<1x1xf32>
    %238 = arith.mulf %219, %219 : vector<8x128xf32>
    %cst_137 = arith.constant dense<0.000000e+00> : vector<8xf32>
    %239 = vector.multi_reduction <add>, %238, %cst_137 [1] : vector<8x128xf32> to vector<8xf32>
    %240 = vector.shape_cast %239 : vector<8xf32> to vector<8x1xf32>
    %cst_138 = arith.constant dense<0.000000e+00> : vector<1xf32>
    %241 = vector.multi_reduction <add>, %240, %cst_138 [0] : vector<8x1xf32> to vector<1xf32>
    %242 = vector.shape_cast %241 : vector<1xf32> to vector<1x1xf32>
    %243 = arith.addf %232, %242 : vector<1x1xf32>
    %cst_139 = arith.constant 4.8828125E-4 : f32
    %244 = vector.broadcast %cst_139 : f32 to vector<1x1xf32>
    %245 = arith.mulf %237, %244 : vector<1x1xf32>
    %cst_140 = arith.constant 4.8828125E-4 : f32
    %246 = vector.broadcast %cst_140 : f32 to vector<1x1xf32>
    %247 = arith.mulf %243, %246 : vector<1x1xf32>
    %248 = arith.mulf %245, %245 : vector<1x1xf32>
    %249 = arith.subf %247, %248 : vector<1x1xf32>
    %cst_141 = arith.constant 0.000000e+00 : f32
    %250 = vector.broadcast %cst_141 : f32 to vector<1x1xf32>
    %251 = arith.maximumf %249, %250 : vector<1x1xf32>
    %c3_142 = arith.constant 3 : index
    %252 = memref.load %arg3[%c3_142] : memref<8xf32, #tpu.memory_space<smem>>
    %cst_143 = arith.constant 9.99999974E-6 : f32
    %253 = vector.broadcast %cst_143 : f32 to vector<1x1xf32>
    %254 = arith.addf %251, %253 : vector<1x1xf32>
    %255 = math.rsqrt %254 : vector<1x1xf32>
    %256 = vector.broadcast %252 : f32 to vector<1x1xf32>
    %257 = arith.mulf %256, %255 : vector<1x1xf32>
    %c3_144 = arith.constant 3 : index
    %258 = memref.load %arg4[%c3_144] : memref<8xf32, #tpu.memory_space<smem>>
    %259 = arith.mulf %257, %245 : vector<1x1xf32>
    %260 = vector.broadcast %258 : f32 to vector<1x1xf32>
    %261 = arith.subf %260, %259 : vector<1x1xf32>
    %262 = vector.broadcast %257 : vector<1x1xf32> to vector<8x128xf32>
    %263 = arith.mulf %214, %262 : vector<8x128xf32>
    %264 = vector.broadcast %261 : vector<1x1xf32> to vector<8x128xf32>
    %265 = arith.addf %263, %264 : vector<8x128xf32>
    %cst_145 = arith.constant 0.000000e+00 : f32
    %266 = vector.broadcast %cst_145 : f32 to vector<8x128xf32>
    %267 = arith.maximumf %265, %266 : vector<8x128xf32>
    %c0_146 = arith.constant 0 : index
    %c3_147 = arith.constant 3 : index
    %c0_148 = arith.constant 0 : index
    %c0_149 = arith.constant 0 : index
    %268 = vector.load %arg5[%c0_146, %c3_147, %c0_148, %c0_149] : memref<2x8x8x128xf32, #tpu.memory_space<vmem>>, vector<1x1x8x128xf32>
    %269 = vector.shape_cast %268 : vector<1x1x8x128xf32> to vector<8x128xf32>
    %270 = vector.shape_cast %267 : vector<8x128xf32> to vector<1x1x8x128xf32>
    tpu.vector_store %arg5[%c0_146, %c3_147, %c0_148, %c0_149], %270 {strides = array<i32>} : memref<2x8x8x128xf32, #tpu.memory_space<vmem>>, vector<1x1x8x128xf32>,
    %271 = vector.broadcast %257 : vector<1x1xf32> to vector<8x128xf32>
    %272 = arith.mulf %219, %271 : vector<8x128xf32>
    %273 = vector.broadcast %261 : vector<1x1xf32> to vector<8x128xf32>
    %274 = arith.addf %272, %273 : vector<8x128xf32>
    %cst_150 = arith.constant 0.000000e+00 : f32
    %275 = vector.broadcast %cst_150 : f32 to vector<8x128xf32>
    %276 = arith.maximumf %274, %275 : vector<8x128xf32>
    %c1_151 = arith.constant 1 : index
    %c3_152 = arith.constant 3 : index
    %c0_153 = arith.constant 0 : index
    %c0_154 = arith.constant 0 : index
    %277 = vector.load %arg5[%c1_151, %c3_152, %c0_153, %c0_154] : memref<2x8x8x128xf32, #tpu.memory_space<vmem>>, vector<1x1x8x128xf32>
    %278 = vector.shape_cast %277 : vector<1x1x8x128xf32> to vector<8x128xf32>
    %279 = vector.shape_cast %276 : vector<8x128xf32> to vector<1x1x8x128xf32>
    tpu.vector_store %arg5[%c1_151, %c3_152, %c0_153, %c0_154], %279 {strides = array<i32>} : memref<2x8x8x128xf32, #tpu.memory_space<vmem>>, vector<1x1x8x128xf32>,
    %c0_155 = arith.constant 0 : index
    %c0_156 = arith.constant 0 : index
    %c0_157 = arith.constant 0 : index
    %280 = vector.load %arg1[%c0_155, %c0_156, %c0_157] : memref<2x8x128xf32, #tpu.memory_space<vmem>>, vector<1x8x128xf32>
    %281 = vector.shape_cast %280 : vector<1x8x128xf32> to vector<8x128xf32>
    %c4 = arith.constant 4 : index
    %c0_158 = arith.constant 0 : index
    %c0_159 = arith.constant 0 : index
    %282 = vector.load %arg2[%c4, %c0_158, %c0_159] : memref<8x128x128xf32, #tpu.memory_space<vmem>>, vector<1x128x128xf32>
    %283 = vector.shape_cast %282 : vector<1x128x128xf32> to vector<128x128xf32>
    %cst_160 = arith.constant dense<0.000000e+00> : vector<8x128xf32>
    %284 = tpu.matmul %281, %283, %cst_160 {dimension_numbers = #tpu.dot_dimension_numbers<[1], [0], [0], [1], [0, 0, 1, 1], [], []>} : vector<8x128xf32>, vector<128x128xf32>, vector<8x128xf32> -> vector<8x128xf32>
    %c1_161 = arith.constant 1 : index
    %c0_162 = arith.constant 0 : index
    %c0_163 = arith.constant 0 : index
    %285 = vector.load %arg1[%c1_161, %c0_162, %c0_163] : memref<2x8x128xf32, #tpu.memory_space<vmem>>, vector<1x8x128xf32>
    %286 = vector.shape_cast %285 : vector<1x8x128xf32> to vector<8x128xf32>
    %c4_164 = arith.constant 4 : index
    %c0_165 = arith.constant 0 : index
    %c0_166 = arith.constant 0 : index
    %287 = vector.load %arg2[%c4_164, %c0_165, %c0_166] : memref<8x128x128xf32, #tpu.memory_space<vmem>>, vector<1x128x128xf32>
    %288 = vector.shape_cast %287 : vector<1x128x128xf32> to vector<128x128xf32>
    %cst_167 = arith.constant dense<0.000000e+00> : vector<8x128xf32>
    %289 = tpu.matmul %286, %288, %cst_167 {dimension_numbers = #tpu.dot_dimension_numbers<[1], [0], [0], [1], [0, 0, 1, 1], [], []>} : vector<8x128xf32>, vector<128x128xf32>, vector<8x128xf32> -> vector<8x128xf32>
    %cst_168 = arith.constant 0.000000e+00 : f32
    %290 = vector.broadcast %cst_168 : f32 to vector<1x1xf32>
    %cst_169 = arith.constant 0.000000e+00 : f32
    %291 = vector.broadcast %cst_169 : f32 to vector<1x1xf32>
    %cst_170 = arith.constant dense<0.000000e+00> : vector<8xf32>
    %292 = vector.multi_reduction <add>, %284, %cst_170 [1] : vector<8x128xf32> to vector<8xf32>
    %293 = vector.shape_cast %292 : vector<8xf32> to vector<8x1xf32>
    %cst_171 = arith.constant dense<0.000000e+00> : vector<1xf32>
    %294 = vector.multi_reduction <add>, %293, %cst_171 [0] : vector<8x1xf32> to vector<1xf32>
    %295 = vector.shape_cast %294 : vector<1xf32> to vector<1x1xf32>
    %296 = arith.addf %290, %295 : vector<1x1xf32>
    %297 = arith.mulf %284, %284 : vector<8x128xf32>
    %cst_172 = arith.constant dense<0.000000e+00> : vector<8xf32>
    %298 = vector.multi_reduction <add>, %297, %cst_172 [1] : vector<8x128xf32> to vector<8xf32>
    %299 = vector.shape_cast %298 : vector<8xf32> to vector<8x1xf32>
    %cst_173 = arith.constant dense<0.000000e+00> : vector<1xf32>
    %300 = vector.multi_reduction <add>, %299, %cst_173 [0] : vector<8x1xf32> to vector<1xf32>
    %301 = vector.shape_cast %300 : vector<1xf32> to vector<1x1xf32>
    %302 = arith.addf %291, %301 : vector<1x1xf32>
    %cst_174 = arith.constant dense<0.000000e+00> : vector<8xf32>
    %303 = vector.multi_reduction <add>, %289, %cst_174 [1] : vector<8x128xf32> to vector<8xf32>
    %304 = vector.shape_cast %303 : vector<8xf32> to vector<8x1xf32>
    %cst_175 = arith.constant dense<0.000000e+00> : vector<1xf32>
    %305 = vector.multi_reduction <add>, %304, %cst_175 [0] : vector<8x1xf32> to vector<1xf32>
    %306 = vector.shape_cast %305 : vector<1xf32> to vector<1x1xf32>
    %307 = arith.addf %296, %306 : vector<1x1xf32>
    %308 = arith.mulf %289, %289 : vector<8x128xf32>
    %cst_176 = arith.constant dense<0.000000e+00> : vector<8xf32>
    %309 = vector.multi_reduction <add>, %308, %cst_176 [1] : vector<8x128xf32> to vector<8xf32>
    %310 = vector.shape_cast %309 : vector<8xf32> to vector<8x1xf32>
    %cst_177 = arith.constant dense<0.000000e+00> : vector<1xf32>
    %311 = vector.multi_reduction <add>, %310, %cst_177 [0] : vector<8x1xf32> to vector<1xf32>
    %312 = vector.shape_cast %311 : vector<1xf32> to vector<1x1xf32>
    %313 = arith.addf %302, %312 : vector<1x1xf32>
    %cst_178 = arith.constant 4.8828125E-4 : f32
    %314 = vector.broadcast %cst_178 : f32 to vector<1x1xf32>
    %315 = arith.mulf %307, %314 : vector<1x1xf32>
    %cst_179 = arith.constant 4.8828125E-4 : f32
    %316 = vector.broadcast %cst_179 : f32 to vector<1x1xf32>
    %317 = arith.mulf %313, %316 : vector<1x1xf32>
    %318 = arith.mulf %315, %315 : vector<1x1xf32>
    %319 = arith.subf %317, %318 : vector<1x1xf32>
    %cst_180 = arith.constant 0.000000e+00 : f32
    %320 = vector.broadcast %cst_180 : f32 to vector<1x1xf32>
    %321 = arith.maximumf %319, %320 : vector<1x1xf32>
    %c4_181 = arith.constant 4 : index
    %322 = memref.load %arg3[%c4_181] : memref<8xf32, #tpu.memory_space<smem>>
    %cst_182 = arith.constant 9.99999974E-6 : f32
    %323 = vector.broadcast %cst_182 : f32 to vector<1x1xf32>
    %324 = arith.addf %321, %323 : vector<1x1xf32>
    %325 = math.rsqrt %324 : vector<1x1xf32>
    %326 = vector.broadcast %322 : f32 to vector<1x1xf32>
    %327 = arith.mulf %326, %325 : vector<1x1xf32>
    %c4_183 = arith.constant 4 : index
    %328 = memref.load %arg4[%c4_183] : memref<8xf32, #tpu.memory_space<smem>>
    %329 = arith.mulf %327, %315 : vector<1x1xf32>
    %330 = vector.broadcast %328 : f32 to vector<1x1xf32>
    %331 = arith.subf %330, %329 : vector<1x1xf32>
    %332 = vector.broadcast %327 : vector<1x1xf32> to vector<8x128xf32>
    %333 = arith.mulf %284, %332 : vector<8x128xf32>
    %334 = vector.broadcast %331 : vector<1x1xf32> to vector<8x128xf32>
    %335 = arith.addf %333, %334 : vector<8x128xf32>
    %cst_184 = arith.constant 0.000000e+00 : f32
    %336 = vector.broadcast %cst_184 : f32 to vector<8x128xf32>
    %337 = arith.maximumf %335, %336 : vector<8x128xf32>
    %c0_185 = arith.constant 0 : index
    %c4_186 = arith.constant 4 : index
    %c0_187 = arith.constant 0 : index
    %c0_188 = arith.constant 0 : index
    %338 = vector.load %arg5[%c0_185, %c4_186, %c0_187, %c0_188] : memref<2x8x8x128xf32, #tpu.memory_space<vmem>>, vector<1x1x8x128xf32>
    %339 = vector.shape_cast %338 : vector<1x1x8x128xf32> to vector<8x128xf32>
    %340 = vector.shape_cast %337 : vector<8x128xf32> to vector<1x1x8x128xf32>
    tpu.vector_store %arg5[%c0_185, %c4_186, %c0_187, %c0_188], %340 {strides = array<i32>} : memref<2x8x8x128xf32, #tpu.memory_space<vmem>>, vector<1x1x8x128xf32>,
    %341 = vector.broadcast %327 : vector<1x1xf32> to vector<8x128xf32>
    %342 = arith.mulf %289, %341 : vector<8x128xf32>
    %343 = vector.broadcast %331 : vector<1x1xf32> to vector<8x128xf32>
    %344 = arith.addf %342, %343 : vector<8x128xf32>
    %cst_189 = arith.constant 0.000000e+00 : f32
    %345 = vector.broadcast %cst_189 : f32 to vector<8x128xf32>
    %346 = arith.maximumf %344, %345 : vector<8x128xf32>
    %c1_190 = arith.constant 1 : index
    %c4_191 = arith.constant 4 : index
    %c0_192 = arith.constant 0 : index
    %c0_193 = arith.constant 0 : index
    %347 = vector.load %arg5[%c1_190, %c4_191, %c0_192, %c0_193] : memref<2x8x8x128xf32, #tpu.memory_space<vmem>>, vector<1x1x8x128xf32>
    %348 = vector.shape_cast %347 : vector<1x1x8x128xf32> to vector<8x128xf32>
    %349 = vector.shape_cast %346 : vector<8x128xf32> to vector<1x1x8x128xf32>
    tpu.vector_store %arg5[%c1_190, %c4_191, %c0_192, %c0_193], %349 {strides = array<i32>} : memref<2x8x8x128xf32, #tpu.memory_space<vmem>>, vector<1x1x8x128xf32>,
    %c0_194 = arith.constant 0 : index
    %c0_195 = arith.constant 0 : index
    %c0_196 = arith.constant 0 : index
    %350 = vector.load %arg1[%c0_194, %c0_195, %c0_196] : memref<2x8x128xf32, #tpu.memory_space<vmem>>, vector<1x8x128xf32>
    %351 = vector.shape_cast %350 : vector<1x8x128xf32> to vector<8x128xf32>
    %c5 = arith.constant 5 : index
    %c0_197 = arith.constant 0 : index
    %c0_198 = arith.constant 0 : index
    %352 = vector.load %arg2[%c5, %c0_197, %c0_198] : memref<8x128x128xf32, #tpu.memory_space<vmem>>, vector<1x128x128xf32>
    %353 = vector.shape_cast %352 : vector<1x128x128xf32> to vector<128x128xf32>
    %cst_199 = arith.constant dense<0.000000e+00> : vector<8x128xf32>
    %354 = tpu.matmul %351, %353, %cst_199 {dimension_numbers = #tpu.dot_dimension_numbers<[1], [0], [0], [1], [0, 0, 1, 1], [], []>} : vector<8x128xf32>, vector<128x128xf32>, vector<8x128xf32> -> vector<8x128xf32>
    %c1_200 = arith.constant 1 : index
    %c0_201 = arith.constant 0 : index
    %c0_202 = arith.constant 0 : index
    %355 = vector.load %arg1[%c1_200, %c0_201, %c0_202] : memref<2x8x128xf32, #tpu.memory_space<vmem>>, vector<1x8x128xf32>
    %356 = vector.shape_cast %355 : vector<1x8x128xf32> to vector<8x128xf32>
    %c5_203 = arith.constant 5 : index
    %c0_204 = arith.constant 0 : index
    %c0_205 = arith.constant 0 : index
    %357 = vector.load %arg2[%c5_203, %c0_204, %c0_205] : memref<8x128x128xf32, #tpu.memory_space<vmem>>, vector<1x128x128xf32>
    %358 = vector.shape_cast %357 : vector<1x128x128xf32> to vector<128x128xf32>
    %cst_206 = arith.constant dense<0.000000e+00> : vector<8x128xf32>
    %359 = tpu.matmul %356, %358, %cst_206 {dimension_numbers = #tpu.dot_dimension_numbers<[1], [0], [0], [1], [0, 0, 1, 1], [], []>} : vector<8x128xf32>, vector<128x128xf32>, vector<8x128xf32> -> vector<8x128xf32>
    %cst_207 = arith.constant 0.000000e+00 : f32
    %360 = vector.broadcast %cst_207 : f32 to vector<1x1xf32>
    %cst_208 = arith.constant 0.000000e+00 : f32
    %361 = vector.broadcast %cst_208 : f32 to vector<1x1xf32>
    %cst_209 = arith.constant dense<0.000000e+00> : vector<8xf32>
    %362 = vector.multi_reduction <add>, %354, %cst_209 [1] : vector<8x128xf32> to vector<8xf32>
    %363 = vector.shape_cast %362 : vector<8xf32> to vector<8x1xf32>
    %cst_210 = arith.constant dense<0.000000e+00> : vector<1xf32>
    %364 = vector.multi_reduction <add>, %363, %cst_210 [0] : vector<8x1xf32> to vector<1xf32>
    %365 = vector.shape_cast %364 : vector<1xf32> to vector<1x1xf32>
    %366 = arith.addf %360, %365 : vector<1x1xf32>
    %367 = arith.mulf %354, %354 : vector<8x128xf32>
    %cst_211 = arith.constant dense<0.000000e+00> : vector<8xf32>
    %368 = vector.multi_reduction <add>, %367, %cst_211 [1] : vector<8x128xf32> to vector<8xf32>
    %369 = vector.shape_cast %368 : vector<8xf32> to vector<8x1xf32>
    %cst_212 = arith.constant dense<0.000000e+00> : vector<1xf32>
    %370 = vector.multi_reduction <add>, %369, %cst_212 [0] : vector<8x1xf32> to vector<1xf32>
    %371 = vector.shape_cast %370 : vector<1xf32> to vector<1x1xf32>
    %372 = arith.addf %361, %371 : vector<1x1xf32>
    %cst_213 = arith.constant dense<0.000000e+00> : vector<8xf32>
    %373 = vector.multi_reduction <add>, %359, %cst_213 [1] : vector<8x128xf32> to vector<8xf32>
    %374 = vector.shape_cast %373 : vector<8xf32> to vector<8x1xf32>
    %cst_214 = arith.constant dense<0.000000e+00> : vector<1xf32>
    %375 = vector.multi_reduction <add>, %374, %cst_214 [0] : vector<8x1xf32> to vector<1xf32>
    %376 = vector.shape_cast %375 : vector<1xf32> to vector<1x1xf32>
    %377 = arith.addf %366, %376 : vector<1x1xf32>
    %378 = arith.mulf %359, %359 : vector<8x128xf32>
    %cst_215 = arith.constant dense<0.000000e+00> : vector<8xf32>
    %379 = vector.multi_reduction <add>, %378, %cst_215 [1] : vector<8x128xf32> to vector<8xf32>
    %380 = vector.shape_cast %379 : vector<8xf32> to vector<8x1xf32>
    %cst_216 = arith.constant dense<0.000000e+00> : vector<1xf32>
    %381 = vector.multi_reduction <add>, %380, %cst_216 [0] : vector<8x1xf32> to vector<1xf32>
    %382 = vector.shape_cast %381 : vector<1xf32> to vector<1x1xf32>
    %383 = arith.addf %372, %382 : vector<1x1xf32>
    %cst_217 = arith.constant 4.8828125E-4 : f32
    %384 = vector.broadcast %cst_217 : f32 to vector<1x1xf32>
    %385 = arith.mulf %377, %384 : vector<1x1xf32>
    %cst_218 = arith.constant 4.8828125E-4 : f32
    %386 = vector.broadcast %cst_218 : f32 to vector<1x1xf32>
    %387 = arith.mulf %383, %386 : vector<1x1xf32>
    %388 = arith.mulf %385, %385 : vector<1x1xf32>
    %389 = arith.subf %387, %388 : vector<1x1xf32>
    %cst_219 = arith.constant 0.000000e+00 : f32
    %390 = vector.broadcast %cst_219 : f32 to vector<1x1xf32>
    %391 = arith.maximumf %389, %390 : vector<1x1xf32>
    %c5_220 = arith.constant 5 : index
    %392 = memref.load %arg3[%c5_220] : memref<8xf32, #tpu.memory_space<smem>>
    %cst_221 = arith.constant 9.99999974E-6 : f32
    %393 = vector.broadcast %cst_221 : f32 to vector<1x1xf32>
    %394 = arith.addf %391, %393 : vector<1x1xf32>
    %395 = math.rsqrt %394 : vector<1x1xf32>
    %396 = vector.broadcast %392 : f32 to vector<1x1xf32>
    %397 = arith.mulf %396, %395 : vector<1x1xf32>
    %c5_222 = arith.constant 5 : index
    %398 = memref.load %arg4[%c5_222] : memref<8xf32, #tpu.memory_space<smem>>
    %399 = arith.mulf %397, %385 : vector<1x1xf32>
    %400 = vector.broadcast %398 : f32 to vector<1x1xf32>
    %401 = arith.subf %400, %399 : vector<1x1xf32>
    %402 = vector.broadcast %397 : vector<1x1xf32> to vector<8x128xf32>
    %403 = arith.mulf %354, %402 : vector<8x128xf32>
    %404 = vector.broadcast %401 : vector<1x1xf32> to vector<8x128xf32>
    %405 = arith.addf %403, %404 : vector<8x128xf32>
    %cst_223 = arith.constant 0.000000e+00 : f32
    %406 = vector.broadcast %cst_223 : f32 to vector<8x128xf32>
    %407 = arith.maximumf %405, %406 : vector<8x128xf32>
    %c0_224 = arith.constant 0 : index
    %c5_225 = arith.constant 5 : index
    %c0_226 = arith.constant 0 : index
    %c0_227 = arith.constant 0 : index
    %408 = vector.load %arg5[%c0_224, %c5_225, %c0_226, %c0_227] : memref<2x8x8x128xf32, #tpu.memory_space<vmem>>, vector<1x1x8x128xf32>
    %409 = vector.shape_cast %408 : vector<1x1x8x128xf32> to vector<8x128xf32>
    %410 = vector.shape_cast %407 : vector<8x128xf32> to vector<1x1x8x128xf32>
    tpu.vector_store %arg5[%c0_224, %c5_225, %c0_226, %c0_227], %410 {strides = array<i32>} : memref<2x8x8x128xf32, #tpu.memory_space<vmem>>, vector<1x1x8x128xf32>,
    %411 = vector.broadcast %397 : vector<1x1xf32> to vector<8x128xf32>
    %412 = arith.mulf %359, %411 : vector<8x128xf32>
    %413 = vector.broadcast %401 : vector<1x1xf32> to vector<8x128xf32>
    %414 = arith.addf %412, %413 : vector<8x128xf32>
    %cst_228 = arith.constant 0.000000e+00 : f32
    %415 = vector.broadcast %cst_228 : f32 to vector<8x128xf32>
    %416 = arith.maximumf %414, %415 : vector<8x128xf32>
    %c1_229 = arith.constant 1 : index
    %c5_230 = arith.constant 5 : index
    %c0_231 = arith.constant 0 : index
    %c0_232 = arith.constant 0 : index
    %417 = vector.load %arg5[%c1_229, %c5_230, %c0_231, %c0_232] : memref<2x8x8x128xf32, #tpu.memory_space<vmem>>, vector<1x1x8x128xf32>
    %418 = vector.shape_cast %417 : vector<1x1x8x128xf32> to vector<8x128xf32>
    %419 = vector.shape_cast %416 : vector<8x128xf32> to vector<1x1x8x128xf32>
    tpu.vector_store %arg5[%c1_229, %c5_230, %c0_231, %c0_232], %419 {strides = array<i32>} : memref<2x8x8x128xf32, #tpu.memory_space<vmem>>, vector<1x1x8x128xf32>,
    %c0_233 = arith.constant 0 : index
    %c0_234 = arith.constant 0 : index
    %c0_235 = arith.constant 0 : index
    %420 = vector.load %arg1[%c0_233, %c0_234, %c0_235] : memref<2x8x128xf32, #tpu.memory_space<vmem>>, vector<1x8x128xf32>
    %421 = vector.shape_cast %420 : vector<1x8x128xf32> to vector<8x128xf32>
    %c6 = arith.constant 6 : index
    %c0_236 = arith.constant 0 : index
    %c0_237 = arith.constant 0 : index
    %422 = vector.load %arg2[%c6, %c0_236, %c0_237] : memref<8x128x128xf32, #tpu.memory_space<vmem>>, vector<1x128x128xf32>
    %423 = vector.shape_cast %422 : vector<1x128x128xf32> to vector<128x128xf32>
    %cst_238 = arith.constant dense<0.000000e+00> : vector<8x128xf32>
    %424 = tpu.matmul %421, %423, %cst_238 {dimension_numbers = #tpu.dot_dimension_numbers<[1], [0], [0], [1], [0, 0, 1, 1], [], []>} : vector<8x128xf32>, vector<128x128xf32>, vector<8x128xf32> -> vector<8x128xf32>
    %c1_239 = arith.constant 1 : index
    %c0_240 = arith.constant 0 : index
    %c0_241 = arith.constant 0 : index
    %425 = vector.load %arg1[%c1_239, %c0_240, %c0_241] : memref<2x8x128xf32, #tpu.memory_space<vmem>>, vector<1x8x128xf32>
    %426 = vector.shape_cast %425 : vector<1x8x128xf32> to vector<8x128xf32>
    %c6_242 = arith.constant 6 : index
    %c0_243 = arith.constant 0 : index
    %c0_244 = arith.constant 0 : index
    %427 = vector.load %arg2[%c6_242, %c0_243, %c0_244] : memref<8x128x128xf32, #tpu.memory_space<vmem>>, vector<1x128x128xf32>
    %428 = vector.shape_cast %427 : vector<1x128x128xf32> to vector<128x128xf32>
    %cst_245 = arith.constant dense<0.000000e+00> : vector<8x128xf32>
    %429 = tpu.matmul %426, %428, %cst_245 {dimension_numbers = #tpu.dot_dimension_numbers<[1], [0], [0], [1], [0, 0, 1, 1], [], []>} : vector<8x128xf32>, vector<128x128xf32>, vector<8x128xf32> -> vector<8x128xf32>
    %cst_246 = arith.constant 0.000000e+00 : f32
    %430 = vector.broadcast %cst_246 : f32 to vector<1x1xf32>
    %cst_247 = arith.constant 0.000000e+00 : f32
    %431 = vector.broadcast %cst_247 : f32 to vector<1x1xf32>
    %cst_248 = arith.constant dense<0.000000e+00> : vector<8xf32>
    %432 = vector.multi_reduction <add>, %424, %cst_248 [1] : vector<8x128xf32> to vector<8xf32>
    %433 = vector.shape_cast %432 : vector<8xf32> to vector<8x1xf32>
    %cst_249 = arith.constant dense<0.000000e+00> : vector<1xf32>
    %434 = vector.multi_reduction <add>, %433, %cst_249 [0] : vector<8x1xf32> to vector<1xf32>
    %435 = vector.shape_cast %434 : vector<1xf32> to vector<1x1xf32>
    %436 = arith.addf %430, %435 : vector<1x1xf32>
    %437 = arith.mulf %424, %424 : vector<8x128xf32>
    %cst_250 = arith.constant dense<0.000000e+00> : vector<8xf32>
    %438 = vector.multi_reduction <add>, %437, %cst_250 [1] : vector<8x128xf32> to vector<8xf32>
    %439 = vector.shape_cast %438 : vector<8xf32> to vector<8x1xf32>
    %cst_251 = arith.constant dense<0.000000e+00> : vector<1xf32>
    %440 = vector.multi_reduction <add>, %439, %cst_251 [0] : vector<8x1xf32> to vector<1xf32>
    %441 = vector.shape_cast %440 : vector<1xf32> to vector<1x1xf32>
    %442 = arith.addf %431, %441 : vector<1x1xf32>
    %cst_252 = arith.constant dense<0.000000e+00> : vector<8xf32>
    %443 = vector.multi_reduction <add>, %429, %cst_252 [1] : vector<8x128xf32> to vector<8xf32>
    %444 = vector.shape_cast %443 : vector<8xf32> to vector<8x1xf32>
    %cst_253 = arith.constant dense<0.000000e+00> : vector<1xf32>
    %445 = vector.multi_reduction <add>, %444, %cst_253 [0] : vector<8x1xf32> to vector<1xf32>
    %446 = vector.shape_cast %445 : vector<1xf32> to vector<1x1xf32>
    %447 = arith.addf %436, %446 : vector<1x1xf32>
    %448 = arith.mulf %429, %429 : vector<8x128xf32>
    %cst_254 = arith.constant dense<0.000000e+00> : vector<8xf32>
    %449 = vector.multi_reduction <add>, %448, %cst_254 [1] : vector<8x128xf32> to vector<8xf32>
    %450 = vector.shape_cast %449 : vector<8xf32> to vector<8x1xf32>
    %cst_255 = arith.constant dense<0.000000e+00> : vector<1xf32>
    %451 = vector.multi_reduction <add>, %450, %cst_255 [0] : vector<8x1xf32> to vector<1xf32>
    %452 = vector.shape_cast %451 : vector<1xf32> to vector<1x1xf32>
    %453 = arith.addf %442, %452 : vector<1x1xf32>
    %cst_256 = arith.constant 4.8828125E-4 : f32
    %454 = vector.broadcast %cst_256 : f32 to vector<1x1xf32>
    %455 = arith.mulf %447, %454 : vector<1x1xf32>
    %cst_257 = arith.constant 4.8828125E-4 : f32
    %456 = vector.broadcast %cst_257 : f32 to vector<1x1xf32>
    %457 = arith.mulf %453, %456 : vector<1x1xf32>
    %458 = arith.mulf %455, %455 : vector<1x1xf32>
    %459 = arith.subf %457, %458 : vector<1x1xf32>
    %cst_258 = arith.constant 0.000000e+00 : f32
    %460 = vector.broadcast %cst_258 : f32 to vector<1x1xf32>
    %461 = arith.maximumf %459, %460 : vector<1x1xf32>
    %c6_259 = arith.constant 6 : index
    %462 = memref.load %arg3[%c6_259] : memref<8xf32, #tpu.memory_space<smem>>
    %cst_260 = arith.constant 9.99999974E-6 : f32
    %463 = vector.broadcast %cst_260 : f32 to vector<1x1xf32>
    %464 = arith.addf %461, %463 : vector<1x1xf32>
    %465 = math.rsqrt %464 : vector<1x1xf32>
    %466 = vector.broadcast %462 : f32 to vector<1x1xf32>
    %467 = arith.mulf %466, %465 : vector<1x1xf32>
    %c6_261 = arith.constant 6 : index
    %468 = memref.load %arg4[%c6_261] : memref<8xf32, #tpu.memory_space<smem>>
    %469 = arith.mulf %467, %455 : vector<1x1xf32>
    %470 = vector.broadcast %468 : f32 to vector<1x1xf32>
    %471 = arith.subf %470, %469 : vector<1x1xf32>
    %472 = vector.broadcast %467 : vector<1x1xf32> to vector<8x128xf32>
    %473 = arith.mulf %424, %472 : vector<8x128xf32>
    %474 = vector.broadcast %471 : vector<1x1xf32> to vector<8x128xf32>
    %475 = arith.addf %473, %474 : vector<8x128xf32>
    %cst_262 = arith.constant 0.000000e+00 : f32
    %476 = vector.broadcast %cst_262 : f32 to vector<8x128xf32>
    %477 = arith.maximumf %475, %476 : vector<8x128xf32>
    %c0_263 = arith.constant 0 : index
    %c6_264 = arith.constant 6 : index
    %c0_265 = arith.constant 0 : index
    %c0_266 = arith.constant 0 : index
    %478 = vector.load %arg5[%c0_263, %c6_264, %c0_265, %c0_266] : memref<2x8x8x128xf32, #tpu.memory_space<vmem>>, vector<1x1x8x128xf32>
    %479 = vector.shape_cast %478 : vector<1x1x8x128xf32> to vector<8x128xf32>
    %480 = vector.shape_cast %477 : vector<8x128xf32> to vector<1x1x8x128xf32>
    tpu.vector_store %arg5[%c0_263, %c6_264, %c0_265, %c0_266], %480 {strides = array<i32>} : memref<2x8x8x128xf32, #tpu.memory_space<vmem>>, vector<1x1x8x128xf32>,
    %481 = vector.broadcast %467 : vector<1x1xf32> to vector<8x128xf32>
    %482 = arith.mulf %429, %481 : vector<8x128xf32>
    %483 = vector.broadcast %471 : vector<1x1xf32> to vector<8x128xf32>
    %484 = arith.addf %482, %483 : vector<8x128xf32>
    %cst_267 = arith.constant 0.000000e+00 : f32
    %485 = vector.broadcast %cst_267 : f32 to vector<8x128xf32>
    %486 = arith.maximumf %484, %485 : vector<8x128xf32>
    %c1_268 = arith.constant 1 : index
    %c6_269 = arith.constant 6 : index
    %c0_270 = arith.constant 0 : index
    %c0_271 = arith.constant 0 : index
    %487 = vector.load %arg5[%c1_268, %c6_269, %c0_270, %c0_271] : memref<2x8x8x128xf32, #tpu.memory_space<vmem>>, vector<1x1x8x128xf32>
    %488 = vector.shape_cast %487 : vector<1x1x8x128xf32> to vector<8x128xf32>
    %489 = vector.shape_cast %486 : vector<8x128xf32> to vector<1x1x8x128xf32>
    tpu.vector_store %arg5[%c1_268, %c6_269, %c0_270, %c0_271], %489 {strides = array<i32>} : memref<2x8x8x128xf32, #tpu.memory_space<vmem>>, vector<1x1x8x128xf32>,
    %c0_272 = arith.constant 0 : index
    %c0_273 = arith.constant 0 : index
    %c0_274 = arith.constant 0 : index
    %490 = vector.load %arg1[%c0_272, %c0_273, %c0_274] : memref<2x8x128xf32, #tpu.memory_space<vmem>>, vector<1x8x128xf32>
    %491 = vector.shape_cast %490 : vector<1x8x128xf32> to vector<8x128xf32>
    %c7 = arith.constant 7 : index
    %c0_275 = arith.constant 0 : index
    %c0_276 = arith.constant 0 : index
    %492 = vector.load %arg2[%c7, %c0_275, %c0_276] : memref<8x128x128xf32, #tpu.memory_space<vmem>>, vector<1x128x128xf32>
    %493 = vector.shape_cast %492 : vector<1x128x128xf32> to vector<128x128xf32>
    %cst_277 = arith.constant dense<0.000000e+00> : vector<8x128xf32>
    %494 = tpu.matmul %491, %493, %cst_277 {dimension_numbers = #tpu.dot_dimension_numbers<[1], [0], [0], [1], [0, 0, 1, 1], [], []>} : vector<8x128xf32>, vector<128x128xf32>, vector<8x128xf32> -> vector<8x128xf32>
    %c1_278 = arith.constant 1 : index
    %c0_279 = arith.constant 0 : index
    %c0_280 = arith.constant 0 : index
    %495 = vector.load %arg1[%c1_278, %c0_279, %c0_280] : memref<2x8x128xf32, #tpu.memory_space<vmem>>, vector<1x8x128xf32>
    %496 = vector.shape_cast %495 : vector<1x8x128xf32> to vector<8x128xf32>
    %c7_281 = arith.constant 7 : index
    %c0_282 = arith.constant 0 : index
    %c0_283 = arith.constant 0 : index
    %497 = vector.load %arg2[%c7_281, %c0_282, %c0_283] : memref<8x128x128xf32, #tpu.memory_space<vmem>>, vector<1x128x128xf32>
    %498 = vector.shape_cast %497 : vector<1x128x128xf32> to vector<128x128xf32>
    %cst_284 = arith.constant dense<0.000000e+00> : vector<8x128xf32>
    %499 = tpu.matmul %496, %498, %cst_284 {dimension_numbers = #tpu.dot_dimension_numbers<[1], [0], [0], [1], [0, 0, 1, 1], [], []>} : vector<8x128xf32>, vector<128x128xf32>, vector<8x128xf32> -> vector<8x128xf32>
    %cst_285 = arith.constant 0.000000e+00 : f32
    %500 = vector.broadcast %cst_285 : f32 to vector<1x1xf32>
    %cst_286 = arith.constant 0.000000e+00 : f32
    %501 = vector.broadcast %cst_286 : f32 to vector<1x1xf32>
    %cst_287 = arith.constant dense<0.000000e+00> : vector<8xf32>
    %502 = vector.multi_reduction <add>, %494, %cst_287 [1] : vector<8x128xf32> to vector<8xf32>
    %503 = vector.shape_cast %502 : vector<8xf32> to vector<8x1xf32>
    %cst_288 = arith.constant dense<0.000000e+00> : vector<1xf32>
    %504 = vector.multi_reduction <add>, %503, %cst_288 [0] : vector<8x1xf32> to vector<1xf32>
    %505 = vector.shape_cast %504 : vector<1xf32> to vector<1x1xf32>
    %506 = arith.addf %500, %505 : vector<1x1xf32>
    %507 = arith.mulf %494, %494 : vector<8x128xf32>
    %cst_289 = arith.constant dense<0.000000e+00> : vector<8xf32>
    %508 = vector.multi_reduction <add>, %507, %cst_289 [1] : vector<8x128xf32> to vector<8xf32>
    %509 = vector.shape_cast %508 : vector<8xf32> to vector<8x1xf32>
    %cst_290 = arith.constant dense<0.000000e+00> : vector<1xf32>
    %510 = vector.multi_reduction <add>, %509, %cst_290 [0] : vector<8x1xf32> to vector<1xf32>
    %511 = vector.shape_cast %510 : vector<1xf32> to vector<1x1xf32>
    %512 = arith.addf %501, %511 : vector<1x1xf32>
    %cst_291 = arith.constant dense<0.000000e+00> : vector<8xf32>
    %513 = vector.multi_reduction <add>, %499, %cst_291 [1] : vector<8x128xf32> to vector<8xf32>
    %514 = vector.shape_cast %513 : vector<8xf32> to vector<8x1xf32>
    %cst_292 = arith.constant dense<0.000000e+00> : vector<1xf32>
    %515 = vector.multi_reduction <add>, %514, %cst_292 [0] : vector<8x1xf32> to vector<1xf32>
    %516 = vector.shape_cast %515 : vector<1xf32> to vector<1x1xf32>
    %517 = arith.addf %506, %516 : vector<1x1xf32>
    %518 = arith.mulf %499, %499 : vector<8x128xf32>
    %cst_293 = arith.constant dense<0.000000e+00> : vector<8xf32>
    %519 = vector.multi_reduction <add>, %518, %cst_293 [1] : vector<8x128xf32> to vector<8xf32>
    %520 = vector.shape_cast %519 : vector<8xf32> to vector<8x1xf32>
    %cst_294 = arith.constant dense<0.000000e+00> : vector<1xf32>
    %521 = vector.multi_reduction <add>, %520, %cst_294 [0] : vector<8x1xf32> to vector<1xf32>
    %522 = vector.shape_cast %521 : vector<1xf32> to vector<1x1xf32>
    %523 = arith.addf %512, %522 : vector<1x1xf32>
    %cst_295 = arith.constant 4.8828125E-4 : f32
    %524 = vector.broadcast %cst_295 : f32 to vector<1x1xf32>
    %525 = arith.mulf %517, %524 : vector<1x1xf32>
    %cst_296 = arith.constant 4.8828125E-4 : f32
    %526 = vector.broadcast %cst_296 : f32 to vector<1x1xf32>
    %527 = arith.mulf %523, %526 : vector<1x1xf32>
    %528 = arith.mulf %525, %525 : vector<1x1xf32>
    %529 = arith.subf %527, %528 : vector<1x1xf32>
    %cst_297 = arith.constant 0.000000e+00 : f32
    %530 = vector.broadcast %cst_297 : f32 to vector<1x1xf32>
    %531 = arith.maximumf %529, %530 : vector<1x1xf32>
    %c7_298 = arith.constant 7 : index
    %532 = memref.load %arg3[%c7_298] : memref<8xf32, #tpu.memory_space<smem>>
    %cst_299 = arith.constant 9.99999974E-6 : f32
    %533 = vector.broadcast %cst_299 : f32 to vector<1x1xf32>
    %534 = arith.addf %531, %533 : vector<1x1xf32>
    %535 = math.rsqrt %534 : vector<1x1xf32>
    %536 = vector.broadcast %532 : f32 to vector<1x1xf32>
    %537 = arith.mulf %536, %535 : vector<1x1xf32>
    %c7_300 = arith.constant 7 : index
    %538 = memref.load %arg4[%c7_300] : memref<8xf32, #tpu.memory_space<smem>>
    %539 = arith.mulf %537, %525 : vector<1x1xf32>
    %540 = vector.broadcast %538 : f32 to vector<1x1xf32>
    %541 = arith.subf %540, %539 : vector<1x1xf32>
    %542 = vector.broadcast %537 : vector<1x1xf32> to vector<8x128xf32>
    %543 = arith.mulf %494, %542 : vector<8x128xf32>
    %544 = vector.broadcast %541 : vector<1x1xf32> to vector<8x128xf32>
    %545 = arith.addf %543, %544 : vector<8x128xf32>
    %cst_301 = arith.constant 0.000000e+00 : f32
    %546 = vector.broadcast %cst_301 : f32 to vector<8x128xf32>
    %547 = arith.maximumf %545, %546 : vector<8x128xf32>
    %c0_302 = arith.constant 0 : index
    %c7_303 = arith.constant 7 : index
    %c0_304 = arith.constant 0 : index
    %c0_305 = arith.constant 0 : index
    %548 = vector.load %arg5[%c0_302, %c7_303, %c0_304, %c0_305] : memref<2x8x8x128xf32, #tpu.memory_space<vmem>>, vector<1x1x8x128xf32>
    %549 = vector.shape_cast %548 : vector<1x1x8x128xf32> to vector<8x128xf32>
    %550 = vector.shape_cast %547 : vector<8x128xf32> to vector<1x1x8x128xf32>
    tpu.vector_store %arg5[%c0_302, %c7_303, %c0_304, %c0_305], %550 {strides = array<i32>} : memref<2x8x8x128xf32, #tpu.memory_space<vmem>>, vector<1x1x8x128xf32>,
    %551 = vector.broadcast %537 : vector<1x1xf32> to vector<8x128xf32>
    %552 = arith.mulf %499, %551 : vector<8x128xf32>
    %553 = vector.broadcast %541 : vector<1x1xf32> to vector<8x128xf32>
    %554 = arith.addf %552, %553 : vector<8x128xf32>
    %cst_306 = arith.constant 0.000000e+00 : f32
    %555 = vector.broadcast %cst_306 : f32 to vector<8x128xf32>
    %556 = arith.maximumf %554, %555 : vector<8x128xf32>
    %c1_307 = arith.constant 1 : index
    %c7_308 = arith.constant 7 : index
    %c0_309 = arith.constant 0 : index
    %c0_310 = arith.constant 0 : index
    %557 = vector.load %arg5[%c1_307, %c7_308, %c0_309, %c0_310] : memref<2x8x8x128xf32, #tpu.memory_space<vmem>>, vector<1x1x8x128xf32>
    %558 = vector.shape_cast %557 : vector<1x1x8x128xf32> to vector<8x128xf32>
    %559 = vector.shape_cast %556 : vector<8x128xf32> to vector<1x1x8x128xf32>
    tpu.vector_store %arg5[%c1_307, %c7_308, %c0_309, %c0_310], %559 {strides = array<i32>} : memref<2x8x8x128xf32, #tpu.memory_space<vmem>>, vector<1x1x8x128xf32>,
    return
  }
  func.func @transform_0(%arg0: i32) -> (i32, i32, i32) {
    %c0_i32 = arith.constant 0 : i32
    %c0_i32_0 = arith.constant 0 : i32
    %c0_i32_1 = arith.constant 0 : i32
    %c0_i32_2 = arith.constant 0 : i32
    return %c0_i32, %c0_i32_0, %c0_i32_1 : i32, i32, i32
  }
  func.func @transform_1(%arg0: i32) -> (i32, i32, i32) {
    %c0_i32 = arith.constant 0 : i32
    %c0_i32_0 = arith.constant 0 : i32
    %c0_i32_1 = arith.constant 0 : i32
    %c0_i32_2 = arith.constant 0 : i32
    return %c0_i32, %c0_i32_0, %c0_i32_1 : i32, i32, i32
  }
  func.func @transform_2(%arg0: i32) -> i32 {
    %c0_i32 = arith.constant 0 : i32
    %c0_i32_0 = arith.constant 0 : i32
    return %c0_i32 : i32
  }
  func.func @transform_3(%arg0: i32) -> i32 {
    %c0_i32 = arith.constant 0 : i32
    %c0_i32_0 = arith.constant 0 : i32
    return %c0_i32 : i32
  }
  func.func @transform_4(%arg0: i32) -> (i32, i32, i32, i32) {
    %c0_i32 = arith.constant 0 : i32
    %c0_i32_0 = arith.constant 0 : i32
    %c0_i32_1 = arith.constant 0 : i32
    %c0_i32_2 = arith.constant 0 : i32
    %c0_i32_3 = arith.constant 0 : i32
    return %c0_i32, %c0_i32_0, %c0_i32_1, %c0_i32_2 : i32, i32, i32, i32
  }
}

</mosaic_0001>

<llo_original>
// kernel: conv_transpose_bn_relu.1
$region0: #{conv_transpose_bn_relu.1}
  #allocation0 [shape = 'u32[]', space=smem, size = 0x4, offset = 0x4, fixed_abs, tag = 'smem constant byte address 0x4 - core index']
  #allocation1 [shape = 'u32[72,128]{1,0:T(1,128)}', space=vmem, size = 0x9000, scoped, tag = 'internal scratch']
  %s0 = inlined_call_operand.vmem [shape: f32[2,8,128], index: 0, kind: input, shape index: {}]
  %s1 = inlined_call_operand.vmem [shape: f32[8,128,128], index: 1, kind: input, shape index: {}]
  %s2 = inlined_call_operand.vmem [shape: f32[8], index: 2, kind: input, shape index: {}]
  %s3 = inlined_call_operand.vmem [shape: f32[8], index: 3, kind: input, shape index: {}]
  %s4 = inlined_call_operand.vmem [shape: f32[2,8,8,128], index: 4, kind: output, shape index: {}]
  %s5 = sld [smem:[#allocation0]]
  $region34: #{conv_transpose_bn_relu.1} parent=0
    _
  %s7 = ssub.s32 1, %s5
  %s8 = scalar_select 0, %s7, %s5
  $region1: #{conv_transpose_bn_relu.1} parent=0
    #allocation2 [shape = 'u8[512]{0}', space=smem, size = 0x200, scoped, tag = 'input window, operand 2, single buffered']
    #allocation3 [shape = 's32[1]{0}', space=sflag, size = 0x4, scoped, tag = 'scoped memory for conv_transpose_bn_relu.1']
    #allocation4 [shape = 'u8[512]{0}', space=smem, size = 0x200, scoped, tag = 'input window, operand 3, single buffered']
    #allocation5 [shape = 's32[1]{0}', space=sflag, size = 0x4, scoped, tag = 'scoped memory for conv_transpose_bn_relu.1']
    %9 = vsyncpa [#allocation3], 0
    %10 = vsyncpa [#allocation5], 0
    // Predicated region
    $region2: #{conv_transpose_bn_relu.1} parent=1 // pred_check
      _
    $region3: #{conv_transpose_bn_relu.1} parent=1 // pred_check_branch
      %12 = sbr.rel (0) target = $region5
    $region4: #{conv_transpose_bn_relu.1} parent=1 // pred_region
      _
    $region5: #{conv_transpose_bn_relu.1} parent=1 // pred_fallthru
      _
    // Predicated region
    $region6: #{conv_transpose_bn_relu.1} parent=1 // pred_check
      _
    $region7: #{conv_transpose_bn_relu.1} parent=1 // pred_check_branch
      %14 = sbr.rel (0) target = $region9
    $region8: #{conv_transpose_bn_relu.1} parent=1 // pred_region
      _
    $region9: #{conv_transpose_bn_relu.1} parent=1 // pred_fallthru
      _
    // Predicated region
    $region10: #{conv_transpose_bn_relu.1} parent=1 // pred_check
      _
    $region11: #{conv_transpose_bn_relu.1} parent=1 // pred_check_branch
      %16 = sbr.rel (0) target = $region13
    $region12: #{conv_transpose_bn_relu.1} parent=1 // pred_region
      %18 = vsyncadd [#allocation3], 0
      %s20 = sshll.u32 %s2, 4
      %s21 = int_to_ptr.vmem [resolvable:$true] %s20
      %23 = dma.vmem_to_smem %s21, 16, [#allocation2], [#allocation3]
    $region13: #{conv_transpose_bn_relu.1} parent=1 // pred_fallthru
      _
    // Predicated region
    $region14: #{conv_transpose_bn_relu.1} parent=1 // pred_check
      _
    $region15: #{conv_transpose_bn_relu.1} parent=1 // pred_check_branch
      %25 = sbr.rel (0) target = $region17
    $region16: #{conv_transpose_bn_relu.1} parent=1 // pred_region
      %27 = vsyncadd [#allocation5], 0
      %s29 = sshll.u32 %s3, 4
      %s30 = int_to_ptr.vmem [resolvable:$true] %s29
      %32 = dma.vmem_to_smem %s30, 16, [#allocation4], [#allocation5]
    $region17: #{conv_transpose_bn_relu.1} parent=1 // pred_fallthru
      _
    // Predicated region
    $region18: #{conv_transpose_bn_relu.1} parent=1 // pred_check
      _
    $region19: #{conv_transpose_bn_relu.1} parent=1 // pred_check_branch
      %34 = sbr.rel (0) target = $region21
    $region20: #{conv_transpose_bn_relu.1} parent=1 // pred_region
      %36 = dma.done [#allocation3], 16
    $region21: #{conv_transpose_bn_relu.1} parent=1 // pred_fallthru
      _
    // Predicated region
    $region22: #{conv_transpose_bn_relu.1} parent=1 // pred_check
      _
    $region23: #{conv_transpose_bn_relu.1} parent=1 // pred_check_branch
      %38 = sbr.rel (0) target = $region25
    $region24: #{conv_transpose_bn_relu.1} parent=1 // pred_region
      %40 = dma.done [#allocation5], 16
    $region25: #{conv_transpose_bn_relu.1} parent=1 // pred_fallthru
      _
    %41 = sfence
    %v42 = vld [vmem:[%s0] sm:$0xff]
    %v43 = vld [vmem:[%s1] sm:$0xff]
    %v44 = vld [vmem:[%s1 + $0x8] sm:$0xff]
    %v45 = vld [vmem:[%s1 + $0x10] sm:$0xff]
    %v46 = vld [vmem:[%s1 + $0x18] sm:$0xff]
    %v47 = vld [vmem:[%s1 + $0x20] sm:$0xff]
    %v48 = vld [vmem:[%s1 + $0x28] sm:$0xff]
    %v49 = vld [vmem:[%s1 + $0x30] sm:$0xff]
    %v50 = vld [vmem:[%s1 + $0x38] sm:$0xff]
    %v51 = vld [vmem:[%s1 + $0x40] sm:$0xff]
    %v52 = vld [vmem:[%s1 + $0x48] sm:$0xff]
    %v53 = vld [vmem:[%s1 + $0x50] sm:$0xff]
    %v54 = vld [vmem:[%s1 + $0x58] sm:$0xff]
    %v55 = vld [vmem:[%s1 + $0x60] sm:$0xff]
    %v56 = vld [vmem:[%s1 + $0x68] sm:$0xff]
    %v57 = vld [vmem:[%s1 + $0x70] sm:$0xff]
    %v58 = vld [vmem:[%s1 + $0x78] sm:$0xff]
    %59 = vmatpush.msra.mxu0 %v58
    %60 = vmatpush.msra.mxu0 %v57
    %61 = vmatpush.msra.mxu0 %v56
    %62 = vmatpush.msra.mxu0 %v55
    %63 = vmatpush.msra.mxu0 %v54
    %64 = vmatpush.msra.mxu0 %v53
    %65 = vmatpush.msra.mxu0 %v52
    %66 = vmatpush.msra.mxu0 %v51
    %67 = vmatpush.msra.mxu0 %v50
    %68 = vmatpush.msra.mxu0 %v49
    %69 = vmatpush.msra.mxu0 %v48
    %70 = vmatpush.msra.mxu0 %v47
    %71 = vmatpush.msra.mxu0 %v46
    %72 = vmatpush.msra.mxu0 %v45
    %73 = vmatpush.msra.mxu0 %v44
    %74 = vmatpush.msra.mxu0 %v43
    %75 = vmatmul.f32.gmra.mxu0 %v42
    %v76 = vpop.f32.mrf.mxu0
    %v77 = vadd.f32 0.0, %v76
    %78 = vdwg.mxu0
    %s79 = scalar_lea.vmem %s0, 8
    %v80 = vld [vmem:[%s79] sm:$0xff]
    %81 = vmatpush.msra.mxu0 %v58
    %82 = vmatpush.msra.mxu0 %v57
    %83 = vmatpush.msra.mxu0 %v56
    %84 = vmatpush.msra.mxu0 %v55
    %85 = vmatpush.msra.mxu0 %v54
    %86 = vmatpush.msra.mxu0 %v53
    %87 = vmatpush.msra.mxu0 %v52
    %88 = vmatpush.msra.mxu0 %v51
    %89 = vmatpush.msra.mxu0 %v50
    %90 = vmatpush.msra.mxu0 %v49
    %91 = vmatpush.msra.mxu0 %v48
    %92 = vmatpush.msra.mxu0 %v47
    %93 = vmatpush.msra.mxu0 %v46
    %94 = vmatpush.msra.mxu0 %v45
    %95 = vmatpush.msra.mxu0 %v44
    %96 = vmatpush.msra.mxu0 %v43
    %97 = vmatmul.f32.gmra.mxu0 %v80
    %v98 = vpop.f32.mrf.mxu0
    %v99 = vadd.f32 0.0, %v98
    %100 = vdwg.mxu0
    %101 = vadd.xlane.f32.xlu0 %v77
    %v102 = vpop.xlane.xlu0 %101
    %v103 = vrot.slane %v102, 4
    %v104 = vadd.f32 %v102, %v103
    %v105 = vrot.slane %v104, 2
    %v106 = vadd.f32 %v104, %v105
    %v107 = vrot.slane %v106, 1
    %v108 = vadd.f32 %v106, %v107
    %v109 = vadd.f32 %v108, 0.0
    %v110 = vmul.f32 %v77, %v77
    %111 = vadd.xlane.f32.xlu0 %v110
    %v112 = vpop.xlane.xlu0 %111
    %v113 = vrot.slane %v112, 4
    %v114 = vadd.f32 %v112, %v113
    %v115 = vrot.slane %v114, 2
    %v116 = vadd.f32 %v114, %v115
    %v117 = vrot.slane %v116, 1
    %v118 = vadd.f32 %v116, %v117
    %v119 = vadd.f32 %v118, 0.0
    %120 = vadd.xlane.f32.xlu0 %v99
    %v121 = vpop.xlane.xlu0 %120
    %v122 = vrot.slane %v121, 4
    %v123 = vadd.f32 %v121, %v122
    %v124 = vrot.slane %v123, 2
    %v125 = vadd.f32 %v123, %v124
    %v126 = vrot.slane %v125, 1
    %v127 = vadd.f32 %v125, %v126
    %v128 = vadd.f32 %v109, %v127
    %v129 = vmul.f32 %v99, %v99
    %130 = vadd.xlane.f32.xlu0 %v129
    %v131 = vpop.xlane.xlu0 %130
    %v132 = vrot.slane %v131, 4
    %v133 = vadd.f32 %v131, %v132
    %v134 = vrot.slane %v133, 2
    %v135 = vadd.f32 %v133, %v134
    %v136 = vrot.slane %v135, 1
    %v137 = vadd.f32 %v135, %v136
    %v138 = vadd.f32 %v119, %v137
    %v139 = vmul.f32 %v128, 0.00048828125
    %v140 = vmul.f32 %v138, 0.00048828125
    %v141 = vmul.f32 %v139, %v139
    %v142 = vsub.f32 %v140, %v141
    %v143 = vmax.f32 %v142, 0.0
    %s144 = sld [smem:[#allocation2]]
    %v145 = vadd.f32 %v143, 1e-05
    %v146 = vrsqrt.pop %v145
    %v147 = vmul.f32 %v146, %v145
    %v148 = vmul.f32 %v147, %v146
    %v149 = vmul.f32 0.5, %v148
    %v150 = vsub.f32 1.5, %v149
    %v151 = vmul.f32 %v146, %v150
    %vm152 = vweird.f32 %v145
    %vm153 = vweird.f32 %v146
    %vm154 = vmor %vm152, %vm153
    %v155 = vsel %vm154, %v146, %v151
    %v156 = vstv %s144
    %v157 = vmul.f32 %v156, %v155
    %s158 = sld [smem:[#allocation4]]
    %v159 = vmul.f32 %v157, %v139
    %v160 = vstv %s158
    %v161 = vsub.f32 %v160, %v159
    %v162 = vmul.f32 %v77, %v157
    %v163 = vadd.f32 %v162, %v161
    %v164 = vmax.f32 %v163, 0.0
    %165 = vst [vmem:[%s4] sm:$0xff] %v164
    %v166 = vmul.f32 %v99, %v157
    %v167 = vadd.f32 %v166, %v161
    %v168 = vmax.f32 %v167, 0.0
    %s169 = scalar_lea.vmem %s4, 64
    %170 = vst [vmem:[%s169] sm:$0xff] %v168
    %v171 = vld [vmem:[%s0] sm:$0xff]
    %s172 = scalar_lea.vmem %s1, 128
    %v173 = vld [vmem:[%s172] sm:$0xff]
    %v174 = vld [vmem:[%s172 + $0x8] sm:$0xff]
    %v175 = vld [vmem:[%s172 + $0x10] sm:$0xff]
    %v176 = vld [vmem:[%s172 + $0x18] sm:$0xff]
    %v177 = vld [vmem:[%s172 + $0x20] sm:$0xff]
    %v178 = vld [vmem:[%s172 + $0x28] sm:$0xff]
    %v179 = vld [vmem:[%s172 + $0x30] sm:$0xff]
    %v180 = vld [vmem:[%s172 + $0x38] sm:$0xff]
    %v181 = vld [vmem:[%s172 + $0x40] sm:$0xff]
    %v182 = vld [vmem:[%s172 + $0x48] sm:$0xff]
    %v183 = vld [vmem:[%s172 + $0x50] sm:$0xff]
    %v184 = vld [vmem:[%s172 + $0x58] sm:$0xff]
    %v185 = vld [vmem:[%s172 + $0x60] sm:$0xff]
    %v186 = vld [vmem:[%s172 + $0x68] sm:$0xff]
    %v187 = vld [vmem:[%s172 + $0x70] sm:$0xff]
    %v188 = vld [vmem:[%s172 + $0x78] sm:$0xff]
    %189 = vmatpush.msra.mxu0 %v188
    %190 = vmatpush.msra.mxu0 %v187
    %191 = vmatpush.msra.mxu0 %v186
    %192 = vmatpush.msra.mxu0 %v185
    %193 = vmatpush.msra.mxu0 %v184
    %194 = vmatpush.msra.mxu0 %v183
    %195 = vmatpush.msra.mxu0 %v182
    %196 = vmatpush.msra.mxu0 %v181
    %197 = vmatpush.msra.mxu0 %v180
    %198 = vmatpush.msra.mxu0 %v179
    %199 = vmatpush.msra.mxu0 %v178
    %200 = vmatpush.msra.mxu0 %v177
    %201 = vmatpush.msra.mxu0 %v176
    %202 = vmatpush.msra.mxu0 %v175
    %203 = vmatpush.msra.mxu0 %v174
    %204 = vmatpush.msra.mxu0 %v173
    %205 = vmatmul.f32.gmra.mxu0 %v171
    %v206 = vpop.f32.mrf.mxu0
    %v207 = vadd.f32 0.0, %v206
    %208 = vdwg.mxu0
    %v209 = vld [vmem:[%s79] sm:$0xff]
    %210 = vmatpush.msra.mxu0 %v188
    %211 = vmatpush.msra.mxu0 %v187
    %212 = vmatpush.msra.mxu0 %v186
    %213 = vmatpush.msra.mxu0 %v185
    %214 = vmatpush.msra.mxu0 %v184
    %215 = vmatpush.msra.mxu0 %v183
    %216 = vmatpush.msra.mxu0 %v182
    %217 = vmatpush.msra.mxu0 %v181
    %218 = vmatpush.msra.mxu0 %v180
    %219 = vmatpush.msra.mxu0 %v179
    %220 = vmatpush.msra.mxu0 %v178
    %221 = vmatpush.msra.mxu0 %v177
    %222 = vmatpush.msra.mxu0 %v176
    %223 = vmatpush.msra.mxu0 %v175
    %224 = vmatpush.msra.mxu0 %v174
    %225 = vmatpush.msra.mxu0 %v173
    %226 = vmatmul.f32.gmra.mxu0 %v209
    %v227 = vpop.f32.mrf.mxu0
    %v228 = vadd.f32 0.0, %v227
    %229 = vdwg.mxu0
    %230 = vadd.xlane.f32.xlu0 %v207
    %v231 = vpop.xlane.xlu0 %230
    %v232 = vrot.slane %v231, 4
    %v233 = vadd.f32 %v231, %v232
    %v234 = vrot.slane %v233, 2
    %v235 = vadd.f32 %v233, %v234
    %v236 = vrot.slane %v235, 1
    %v237 = vadd.f32 %v235, %v236
    %v238 = vadd.f32 %v237, 0.0
    %v239 = vmul.f32 %v207, %v207
    %240 = vadd.xlane.f32.xlu0 %v239
    %v241 = vpop.xlane.xlu0 %240
    %v242 = vrot.slane %v241, 4
    %v243 = vadd.f32 %v241, %v242
    %v244 = vrot.slane %v243, 2
    %v245 = vadd.f32 %v243, %v244
    %v246 = vrot.slane %v245, 1
    %v247 = vadd.f32 %v245, %v246
    %v248 = vadd.f32 %v247, 0.0
    %249 = vadd.xlane.f32.xlu0 %v228
    %v250 = vpop.xlane.xlu0 %249
    %v251 = vrot.slane %v250, 4
    %v252 = vadd.f32 %v250, %v251
    %v253 = vrot.slane %v252, 2
    %v254 = vadd.f32 %v252, %v253
    %v255 = vrot.slane %v254, 1
    %v256 = vadd.f32 %v254, %v255
    %v257 = vadd.f32 %v238, %v256
    %v258 = vmul.f32 %v228, %v228
    %259 = vadd.xlane.f32.xlu0 %v258
    %v260 = vpop.xlane.xlu0 %259
    %v261 = vrot.slane %v260, 4
    %v262 = vadd.f32 %v260, %v261
    %v263 = vrot.slane %v262, 2
    %v264 = vadd.f32 %v262, %v263
    %v265 = vrot.slane %v264, 1
    %v266 = vadd.f32 %v264, %v265
    %v267 = vadd.f32 %v248, %v266
    %v268 = vmul.f32 %v257, 0.00048828125
    %v269 = vmul.f32 %v267, 0.00048828125
    %v270 = vmul.f32 %v268, %v268
    %v271 = vsub.f32 %v269, %v270
    %v272 = vmax.f32 %v271, 0.0
    %s273 = sld [smem:[#allocation2 + $0x1]]
    %v274 = vadd.f32 %v272, 1e-05
    %v275 = vrsqrt.pop %v274
    %v276 = vmul.f32 %v275, %v274
    %v277 = vmul.f32 %v276, %v275
    %v278 = vmul.f32 0.5, %v277
    %v279 = vsub.f32 1.5, %v278
    %v280 = vmul.f32 %v275, %v279
    %vm281 = vweird.f32 %v274
    %vm282 = vweird.f32 %v275
    %vm283 = vmor %vm281, %vm282
    %v284 = vsel %vm283, %v275, %v280
    %v285 = vstv %s273
    %v286 = vmul.f32 %v285, %v284
    %s287 = sld [smem:[#allocation4 + $0x1]]
    %v288 = vmul.f32 %v286, %v268
    %v289 = vstv %s287
    %v290 = vsub.f32 %v289, %v288
    %v291 = vmul.f32 %v207, %v286
    %v292 = vadd.f32 %v291, %v290
    %v293 = vmax.f32 %v292, 0.0
    %s294 = scalar_lea.vmem %s4, 8
    %295 = vst [vmem:[%s294] sm:$0xff] %v293
    %v296 = vmul.f32 %v228, %v286
    %v297 = vadd.f32 %v296, %v290
    %v298 = vmax.f32 %v297, 0.0
    %s299 = scalar_lea.vmem %s4, 72
    %300 = vst [vmem:[%s299] sm:$0xff] %v298
    %v301 = vld [vmem:[%s0] sm:$0xff]
    %s302 = scalar_lea.vmem %s1, 256
    %v303 = vld [vmem:[%s302] sm:$0xff]
    %v304 = vld [vmem:[%s302 + $0x8] sm:$0xff]
    %v305 = vld [vmem:[%s302 + $0x10] sm:$0xff]
    %v306 = vld [vmem:[%s302 + $0x18] sm:$0xff]
    %v307 = vld [vmem:[%s302 + $0x20] sm:$0xff]
    %v308 = vld [vmem:[%s302 + $0x28] sm:$0xff]
    %v309 = vld [vmem:[%s302 + $0x30] sm:$0xff]
    %v310 = vld [vmem:[%s302 + $0x38] sm:$0xff]
    %v311 = vld [vmem:[%s302 + $0x40] sm:$0xff]
    %v312 = vld [vmem:[%s302 + $0x48] sm:$0xff]
    %v313 = vld [vmem:[%s302 + $0x50] sm:$0xff]
    %v314 = vld [vmem:[%s302 + $0x58] sm:$0xff]
    %v315 = vld [vmem:[%s302 + $0x60] sm:$0xff]
    %v316 = vld [vmem:[%s302 + $0x68] sm:$0xff]
    %v317 = vld [vmem:[%s302 + $0x70] sm:$0xff]
    %v318 = vld [vmem:[%s302 + $0x78] sm:$0xff]
    %319 = vmatpush.msra.mxu0 %v318
    %320 = vmatpush.msra.mxu0 %v317
    %321 = vmatpush.msra.mxu0 %v316
    %322 = vmatpush.msra.mxu0 %v315
    %323 = vmatpush.msra.mxu0 %v314
    %324 = vmatpush.msra.mxu0 %v313
    %325 = vmatpush.msra.mxu0 %v312
    %326 = vmatpush.msra.mxu0 %v311
    %327 = vmatpush.msra.mxu0 %v310
    %328 = vmatpush.msra.mxu0 %v309
    %329 = vmatpush.msra.mxu0 %v308
    %330 = vmatpush.msra.mxu0 %v307
    %331 = vmatpush.msra.mxu0 %v306
    %332 = vmatpush.msra.mxu0 %v305
    %333 = vmatpush.msra.mxu0 %v304
    %334 = vmatpush.msra.mxu0 %v303
    %335 = vmatmul.f32.gmra.mxu0 %v301
    %v336 = vpop.f32.mrf.mxu0
    %v337 = vadd.f32 0.0, %v336
    %338 = vdwg.mxu0
    %v339 = vld [vmem:[%s79] sm:$0xff]
    %340 = vmatpush.msra.mxu0 %v318
    %341 = vmatpush.msra.mxu0 %v317
    %342 = vmatpush.msra.mxu0 %v316
    %343 = vmatpush.msra.mxu0 %v315
    %344 = vmatpush.msra.mxu0 %v314
    %345 = vmatpush.msra.mxu0 %v313
    %346 = vmatpush.msra.mxu0 %v312
    %347 = vmatpush.msra.mxu0 %v311
    %348 = vmatpush.msra.mxu0 %v310
    %349 = vmatpush.msra.mxu0 %v309
    %350 = vmatpush.msra.mxu0 %v308
    %351 = vmatpush.msra.mxu0 %v307
    %352 = vmatpush.msra.mxu0 %v306
    %353 = vmatpush.msra.mxu0 %v305
    %354 = vmatpush.msra.mxu0 %v304
    %355 = vmatpush.msra.mxu0 %v303
    %356 = vmatmul.f32.gmra.mxu0 %v339
    %v357 = vpop.f32.mrf.mxu0
    %v358 = vadd.f32 0.0, %v357
    %359 = vdwg.mxu0
    %360 = vadd.xlane.f32.xlu0 %v337
    %v361 = vpop.xlane.xlu0 %360
    %v362 = vrot.slane %v361, 4
    %v363 = vadd.f32 %v361, %v362
    %v364 = vrot.slane %v363, 2
    %v365 = vadd.f32 %v363, %v364
    %v366 = vrot.slane %v365, 1
    %v367 = vadd.f32 %v365, %v366
    %v368 = vadd.f32 %v367, 0.0
    %v369 = vmul.f32 %v337, %v337
    %370 = vadd.xlane.f32.xlu0 %v369
    %v371 = vpop.xlane.xlu0 %370
    %v372 = vrot.slane %v371, 4
    %v373 = vadd.f32 %v371, %v372
    %v374 = vrot.slane %v373, 2
    %v375 = vadd.f32 %v373, %v374
    %v376 = vrot.slane %v375, 1
    %v377 = vadd.f32 %v375, %v376
    %v378 = vadd.f32 %v377, 0.0
    %379 = vadd.xlane.f32.xlu0 %v358
    %v380 = vpop.xlane.xlu0 %379
    %v381 = vrot.slane %v380, 4
    %v382 = vadd.f32 %v380, %v381
    %v383 = vrot.slane %v382, 2
    %v384 = vadd.f32 %v382, %v383
    %v385 = vrot.slane %v384, 1
    %v386 = vadd.f32 %v384, %v385
    %v387 = vadd.f32 %v368, %v386
    %v388 = vmul.f32 %v358, %v358
    %389 = vadd.xlane.f32.xlu0 %v388
    %v390 = vpop.xlane.xlu0 %389
    %v391 = vrot.slane %v390, 4
    %v392 = vadd.f32 %v390, %v391
    %v393 = vrot.slane %v392, 2
    %v394 = vadd.f32 %v392, %v393
    %v395 = vrot.slane %v394, 1
    %v396 = vadd.f32 %v394, %v395
    %v397 = vadd.f32 %v378, %v396
    %v398 = vmul.f32 %v387, 0.00048828125
    %v399 = vmul.f32 %v397, 0.00048828125
    %v400 = vmul.f32 %v398, %v398
    %v401 = vsub.f32 %v399, %v400
    %v402 = vmax.f32 %v401, 0.0
    %s403 = sld [smem:[#allocation2 + $0x2]]
    %v404 = vadd.f32 %v402, 1e-05
    %v405 = vrsqrt.pop %v404
    %v406 = vmul.f32 %v405, %v404
    %v407 = vmul.f32 %v406, %v405
    %v408 = vmul.f32 0.5, %v407
    %v409 = vsub.f32 1.5, %v408
    %v410 = vmul.f32 %v405, %v409
    %vm411 = vweird.f32 %v404
    %vm412 = vweird.f32 %v405
    %vm413 = vmor %vm411, %vm412
    %v414 = vsel %vm413, %v405, %v410
    %v415 = vstv %s403
    %v416 = vmul.f32 %v415, %v414
    %s417 = sld [smem:[#allocation4 + $0x2]]
    %v418 = vmul.f32 %v416, %v398
    %v419 = vstv %s417
    %v420 = vsub.f32 %v419, %v418
    %v421 = vmul.f32 %v337, %v416
    %v422 = vadd.f32 %v421, %v420
    %v423 = vmax.f32 %v422, 0.0
    %s424 = scalar_lea.vmem %s4, 16
    %425 = vst [vmem:[%s424] sm:$0xff] %v423
    %v426 = vmul.f32 %v358, %v416
    %v427 = vadd.f32 %v426, %v420
    %v428 = vmax.f32 %v427, 0.0
    %s429 = scalar_lea.vmem %s4, 80
    %430 = vst [vmem:[%s429] sm:$0xff] %v428
    %v431 = vld [vmem:[%s0] sm:$0xff]
    %s432 = scalar_lea.vmem %s1, 384
    %v433 = vld [vmem:[%s432] sm:$0xff]
    %v434 = vld [vmem:[%s432 + $0x8] sm:$0xff]
    %v435 = vld [vmem:[%s432 + $0x10] sm:$0xff]
    %v436 = vld [vmem:[%s432 + $0x18] sm:$0xff]
    %v437 = vld [vmem:[%s432 + $0x20] sm:$0xff]
    %v438 = vld [vmem:[%s432 + $0x28] sm:$0xff]
    %v439 = vld [vmem:[%s432 + $0x30] sm:$0xff]
    %v440 = vld [vmem:[%s432 + $0x38] sm:$0xff]
    %v441 = vld [vmem:[%s432 + $0x40] sm:$0xff]
    %v442 = vld [vmem:[%s432 + $0x48] sm:$0xff]
    %v443 = vld [vmem:[%s432 + $0x50] sm:$0xff]
    %v444 = vld [vmem:[%s432 + $0x58] sm:$0xff]
    %v445 = vld [vmem:[%s432 + $0x60] sm:$0xff]
    %v446 = vld [vmem:[%s432 + $0x68] sm:$0xff]
    %v447 = vld [vmem:[%s432 + $0x70] sm:$0xff]
    %v448 = vld [vmem:[%s432 + $0x78] sm:$0xff]
    %449 = vmatpush.msra.mxu0 %v448
    %450 = vmatpush.msra.mxu0 %v447
    %451 = vmatpush.msra.mxu0 %v446
    %452 = vmatpush.msra.mxu0 %v445
    %453 = vmatpush.msra.mxu0 %v444
    %454 = vmatpush.msra.mxu0 %v443
    %455 = vmatpush.msra.mxu0 %v442
    %456 = vmatpush.msra.mxu0 %v441
    %457 = vmatpush.msra.mxu0 %v440
    %458 = vmatpush.msra.mxu0 %v439
    %459 = vmatpush.msra.mxu0 %v438
    %460 = vmatpush.msra.mxu0 %v437
    %461 = vmatpush.msra.mxu0 %v436
    %462 = vmatpush.msra.mxu0 %v435
    %463 = vmatpush.msra.mxu0 %v434
    %464 = vmatpush.msra.mxu0 %v433
    %465 = vmatmul.f32.gmra.mxu0 %v431
    %v466 = vpop.f32.mrf.mxu0
    %v467 = vadd.f32 0.0, %v466
    %468 = vdwg.mxu0
    %v469 = vld [vmem:[%s79] sm:$0xff]
    %470 = vmatpush.msra.mxu0 %v448
    %471 = vmatpush.msra.mxu0 %v447
    %472 = vmatpush.msra.mxu0 %v446
    %473 = vmatpush.msra.mxu0 %v445
    %474 = vmatpush.msra.mxu0 %v444
    %475 = vmatpush.msra.mxu0 %v443
    %476 = vmatpush.msra.mxu0 %v442
    %477 = vmatpush.msra.mxu0 %v441
    %478 = vmatpush.msra.mxu0 %v440
    %479 = vmatpush.msra.mxu0 %v439
    %480 = vmatpush.msra.mxu0 %v438
    %481 = vmatpush.msra.mxu0 %v437
    %482 = vmatpush.msra.mxu0 %v436
    %483 = vmatpush.msra.mxu0 %v435
    %484 = vmatpush.msra.mxu0 %v434
    %485 = vmatpush.msra.mxu0 %v433
    %486 = vmatmul.f32.gmra.mxu0 %v469
    %v487 = vpop.f32.mrf.mxu0
    %v488 = vadd.f32 0.0, %v487
    %489 = vdwg.mxu0
    %490 = vadd.xlane.f32.xlu0 %v467
    %v491 = vpop.xlane.xlu0 %490
    %v492 = vrot.slane %v491, 4
    %v493 = vadd.f32 %v491, %v492
    %v494 = vrot.slane %v493, 2
    %v495 = vadd.f32 %v493, %v494
    %v496 = vrot.slane %v495, 1
    %v497 = vadd.f32 %v495, %v496
    %v498 = vadd.f32 %v497, 0.0
    %v499 = vmul.f32 %v467, %v467
    %500 = vadd.xlane.f32.xlu0 %v499
    %v501 = vpop.xlane.xlu0 %500
    %v502 = vrot.slane %v501, 4
    %v503 = vadd.f32 %v501, %v502
    %v504 = vrot.slane %v503, 2
    %v505 = vadd.f32 %v503, %v504
    %v506 = vrot.slane %v505, 1
    %v507 = vadd.f32 %v505, %v506
    %v508 = vadd.f32 %v507, 0.0
    %509 = vadd.xlane.f32.xlu0 %v488
    %v510 = vpop.xlane.xlu0 %509
    %v511 = vrot.slane %v510, 4
    %v512 = vadd.f32 %v510, %v511
    %v513 = vrot.slane %v512, 2
    %v514 = vadd.f32 %v512, %v513
    %v515 = vrot.slane %v514, 1
    %v516 = vadd.f32 %v514, %v515
    %v517 = vadd.f32 %v498, %v516
    %v518 = vmul.f32 %v488, %v488
    %519 = vadd.xlane.f32.xlu0 %v518
    %v520 = vpop.xlane.xlu0 %519
    %v521 = vrot.slane %v520, 4
    %v522 = vadd.f32 %v520, %v521
    %v523 = vrot.slane %v522, 2
    %v524 = vadd.f32 %v522, %v523
    %v525 = vrot.slane %v524, 1
    %v526 = vadd.f32 %v524, %v525
    %v527 = vadd.f32 %v508, %v526
    %v528 = vmul.f32 %v517, 0.00048828125
    %v529 = vmul.f32 %v527, 0.00048828125
    %v530 = vmul.f32 %v528, %v528
    %v531 = vsub.f32 %v529, %v530
    %v532 = vmax.f32 %v531, 0.0
    %s533 = sld [smem:[#allocation2 + $0x3]]
    %v534 = vadd.f32 %v532, 1e-05
    %v535 = vrsqrt.pop %v534
    %v536 = vmul.f32 %v535, %v534
    %v537 = vmul.f32 %v536, %v535
    %v538 = vmul.f32 0.5, %v537
    %v539 = vsub.f32 1.5, %v538
    %v540 = vmul.f32 %v535, %v539
    %vm541 = vweird.f32 %v534
    %vm542 = vweird.f32 %v535
    %vm543 = vmor %vm541, %vm542
    %v544 = vsel %vm543, %v535, %v540
    %v545 = vstv %s533
    %v546 = vmul.f32 %v545, %v544
    %s547 = sld [smem:[#allocation4 + $0x3]]
    %v548 = vmul.f32 %v546, %v528
    %v549 = vstv %s547
    %v550 = vsub.f32 %v549, %v548
    %v551 = vmul.f32 %v467, %v546
    %v552 = vadd.f32 %v551, %v550
    %v553 = vmax.f32 %v552, 0.0
    %s554 = scalar_lea.vmem %s4, 24
    %555 = vst [vmem:[%s554] sm:$0xff] %v553
    %v556 = vmul.f32 %v488, %v546
    %v557 = vadd.f32 %v556, %v550
    %v558 = vmax.f32 %v557, 0.0
    %s559 = scalar_lea.vmem %s4, 88
    %560 = vst [vmem:[%s559] sm:$0xff] %v558
    %v561 = vld [vmem:[%s0] sm:$0xff]
    %s562 = scalar_lea.vmem %s1, 512
    %v563 = vld [vmem:[%s562] sm:$0xff]
    %v564 = vld [vmem:[%s562 + $0x8] sm:$0xff]
    %v565 = vld [vmem:[%s562 + $0x10] sm:$0xff]
    %v566 = vld [vmem:[%s562 + $0x18] sm:$0xff]
    %v567 = vld [vmem:[%s562 + $0x20] sm:$0xff]
    %v568 = vld [vmem:[%s562 + $0x28] sm:$0xff]
    %v569 = vld [vmem:[%s562 + $0x30] sm:$0xff]
    %v570 = vld [vmem:[%s562 + $0x38] sm:$0xff]
    %v571 = vld [vmem:[%s562 + $0x40] sm:$0xff]
    %v572 = vld [vmem:[%s562 + $0x48] sm:$0xff]
    %v573 = vld [vmem:[%s562 + $0x50] sm:$0xff]
    %v574 = vld [vmem:[%s562 + $0x58] sm:$0xff]
    %v575 = vld [vmem:[%s562 + $0x60] sm:$0xff]
    %v576 = vld [vmem:[%s562 + $0x68] sm:$0xff]
    %v577 = vld [vmem:[%s562 + $0x70] sm:$0xff]
    %v578 = vld [vmem:[%s562 + $0x78] sm:$0xff]
    %579 = vmatpush.msra.mxu0 %v578
    %580 = vmatpush.msra.mxu0 %v577
    %581 = vmatpush.msra.mxu0 %v576
    %582 = vmatpush.msra.mxu0 %v575
    %583 = vmatpush.msra.mxu0 %v574
    %584 = vmatpush.msra.mxu0 %v573
    %585 = vmatpush.msra.mxu0 %v572
    %586 = vmatpush.msra.mxu0 %v571
    %587 = vmatpush.msra.mxu0 %v570
    %588 = vmatpush.msra.mxu0 %v569
    %589 = vmatpush.msra.mxu0 %v568
    %590 = vmatpush.msra.mxu0 %v567
    %591 = vmatpush.msra.mxu0 %v566
    %592 = vmatpush.msra.mxu0 %v565
    %593 = vmatpush.msra.mxu0 %v564
    %594 = vmatpush.msra.mxu0 %v563
    %595 = vmatmul.f32.gmra.mxu0 %v561
    %v596 = vpop.f32.mrf.mxu0
    %v597 = vadd.f32 0.0, %v596
    %598 = vdwg.mxu0
    %v599 = vld [vmem:[%s79] sm:$0xff]
    %600 = vmatpush.msra.mxu0 %v578
    %601 = vmatpush.msra.mxu0 %v577
    %602 = vmatpush.msra.mxu0 %v576
    %603 = vmatpush.msra.mxu0 %v575
    %604 = vmatpush.msra.mxu0 %v574
    %605 = vmatpush.msra.mxu0 %v573
    %606 = vmatpush.msra.mxu0 %v572
    %607 = vmatpush.msra.mxu0 %v571
    %608 = vmatpush.msra.mxu0 %v570
    %609 = vmatpush.msra.mxu0 %v569
    %610 = vmatpush.msra.mxu0 %v568
    %611 = vmatpush.msra.mxu0 %v567
    %612 = vmatpush.msra.mxu0 %v566
    %613 = vmatpush.msra.mxu0 %v565
    %614 = vmatpush.msra.mxu0 %v564
    %615 = vmatpush.msra.mxu0 %v563
    %616 = vmatmul.f32.gmra.mxu0 %v599
    %v617 = vpop.f32.mrf.mxu0
    %v618 = vadd.f32 0.0, %v617
    %619 = vdwg.mxu0
    %620 = vadd.xlane.f32.xlu0 %v597
    %v621 = vpop.xlane.xlu0 %620
    %v622 = vrot.slane %v621, 4
    %v623 = vadd.f32 %v621, %v622
    %v624 = vrot.slane %v623, 2
    %v625 = vadd.f32 %v623, %v624
    %v626 = vrot.slane %v625, 1
    %v627 = vadd.f32 %v625, %v626
    %v628 = vadd.f32 %v627, 0.0
    %v629 = vmul.f32 %v597, %v597
    %630 = vadd.xlane.f32.xlu0 %v629
    %v631 = vpop.xlane.xlu0 %630
    %v632 = vrot.slane %v631, 4
    %v633 = vadd.f32 %v631, %v632
    %v634 = vrot.slane %v633, 2
    %v635 = vadd.f32 %v633, %v634
    %v636 = vrot.slane %v635, 1
    %v637 = vadd.f32 %v635, %v636
    %v638 = vadd.f32 %v637, 0.0
    %639 = vadd.xlane.f32.xlu0 %v618
    %v640 = vpop.xlane.xlu0 %639
    %v641 = vrot.slane %v640, 4
    %v642 = vadd.f32 %v640, %v641
    %v643 = vrot.slane %v642, 2
    %v644 = vadd.f32 %v642, %v643
    %v645 = vrot.slane %v644, 1
    %v646 = vadd.f32 %v644, %v645
    %v647 = vadd.f32 %v628, %v646
    %v648 = vmul.f32 %v618, %v618
    %649 = vadd.xlane.f32.xlu0 %v648
    %v650 = vpop.xlane.xlu0 %649
    %v651 = vrot.slane %v650, 4
    %v652 = vadd.f32 %v650, %v651
    %v653 = vrot.slane %v652, 2
    %v654 = vadd.f32 %v652, %v653
    %v655 = vrot.slane %v654, 1
    %v656 = vadd.f32 %v654, %v655
    %v657 = vadd.f32 %v638, %v656
    %v658 = vmul.f32 %v647, 0.00048828125
    %v659 = vmul.f32 %v657, 0.00048828125
    %v660 = vmul.f32 %v658, %v658
    %v661 = vsub.f32 %v659, %v660
    %v662 = vmax.f32 %v661, 0.0
    %s663 = sld [smem:[#allocation2 + $0x4]]
    %v664 = vadd.f32 %v662, 1e-05
    %v665 = vrsqrt.pop %v664
    %v666 = vmul.f32 %v665, %v664
    %v667 = vmul.f32 %v666, %v665
    %v668 = vmul.f32 0.5, %v667
    %v669 = vsub.f32 1.5, %v668
    %v670 = vmul.f32 %v665, %v669
    %vm671 = vweird.f32 %v664
    %vm672 = vweird.f32 %v665
    %vm673 = vmor %vm671, %vm672
    %v674 = vsel %vm673, %v665, %v670
    %v675 = vstv %s663
    %v676 = vmul.f32 %v675, %v674
    %s677 = sld [smem:[#allocation4 + $0x4]]
    %v678 = vmul.f32 %v676, %v658
    %v679 = vstv %s677
    %v680 = vsub.f32 %v679, %v678
    %v681 = vmul.f32 %v597, %v676
    %v682 = vadd.f32 %v681, %v680
    %v683 = vmax.f32 %v682, 0.0
    %s684 = scalar_lea.vmem %s4, 32
    %685 = vst [vmem:[%s684] sm:$0xff] %v683
    %v686 = vmul.f32 %v618, %v676
    %v687 = vadd.f32 %v686, %v680
    %v688 = vmax.f32 %v687, 0.0
    %s689 = scalar_lea.vmem %s4, 96
    %690 = vst [vmem:[%s689] sm:$0xff] %v688
    %v691 = vld [vmem:[%s0] sm:$0xff]
    %s692 = scalar_lea.vmem %s1, 640
    %v693 = vld [vmem:[%s692] sm:$0xff]
    %v694 = vld [vmem:[%s692 + $0x8] sm:$0xff]
    %v695 = vld [vmem:[%s692 + $0x10] sm:$0xff]
    %v696 = vld [vmem:[%s692 + $0x18] sm:$0xff]
    %v697 = vld [vmem:[%s692 + $0x20] sm:$0xff]
    %v698 = vld [vmem:[%s692 + $0x28] sm:$0xff]
    %v699 = vld [vmem:[%s692 + $0x30] sm:$0xff]
    %v700 = vld [vmem:[%s692 + $0x38] sm:$0xff]
    %v701 = vld [vmem:[%s692 + $0x40] sm:$0xff]
    %v702 = vld [vmem:[%s692 + $0x48] sm:$0xff]
    %v703 = vld [vmem:[%s692 + $0x50] sm:$0xff]
    %v704 = vld [vmem:[%s692 + $0x58] sm:$0xff]
    %v705 = vld [vmem:[%s692 + $0x60] sm:$0xff]
    %v706 = vld [vmem:[%s692 + $0x68] sm:$0xff]
    %v707 = vld [vmem:[%s692 + $0x70] sm:$0xff]
    %v708 = vld [vmem:[%s692 + $0x78] sm:$0xff]
    %709 = vmatpush.msra.mxu0 %v708
    %710 = vmatpush.msra.mxu0 %v707
    %711 = vmatpush.msra.mxu0 %v706
    %712 = vmatpush.msra.mxu0 %v705
    %713 = vmatpush.msra.mxu0 %v704
    %714 = vmatpush.msra.mxu0 %v703
    %715 = vmatpush.msra.mxu0 %v702
    %716 = vmatpush.msra.mxu0 %v701
    %717 = vmatpush.msra.mxu0 %v700
    %718 = vmatpush.msra.mxu0 %v699
    %719 = vmatpush.msra.mxu0 %v698
    %720 = vmatpush.msra.mxu0 %v697
    %721 = vmatpush.msra.mxu0 %v696
    %722 = vmatpush.msra.mxu0 %v695
    %723 = vmatpush.msra.mxu0 %v694
    %724 = vmatpush.msra.mxu0 %v693
    %725 = vmatmul.f32.gmra.mxu0 %v691
    %v726 = vpop.f32.mrf.mxu0
    %v727 = vadd.f32 0.0, %v726
    %728 = vdwg.mxu0
    %v729 = vld [vmem:[%s79] sm:$0xff]
    %730 = vmatpush.msra.mxu0 %v708
    %731 = vmatpush.msra.mxu0 %v707
    %732 = vmatpush.msra.mxu0 %v706
    %733 = vmatpush.msra.mxu0 %v705
    %734 = vmatpush.msra.mxu0 %v704
    %735 = vmatpush.msra.mxu0 %v703
    %736 = vmatpush.msra.mxu0 %v702
    %737 = vmatpush.msra.mxu0 %v701
    %738 = vmatpush.msra.mxu0 %v700
    %739 = vmatpush.msra.mxu0 %v699
    %740 = vmatpush.msra.mxu0 %v698
    %741 = vmatpush.msra.mxu0 %v697
    %742 = vmatpush.msra.mxu0 %v696
    %743 = vmatpush.msra.mxu0 %v695
    %744 = vmatpush.msra.mxu0 %v694
    %745 = vmatpush.msra.mxu0 %v693
    %746 = vmatmul.f32.gmra.mxu0 %v729
    %v747 = vpop.f32.mrf.mxu0
    %v748 = vadd.f32 0.0, %v747
    %749 = vdwg.mxu0
    %750 = vadd.xlane.f32.xlu0 %v727
    %v751 = vpop.xlane.xlu0 %750
    %v752 = vrot.slane %v751, 4
    %v753 = vadd.f32 %v751, %v752
    %v754 = vrot.slane %v753, 2
    %v755 = vadd.f32 %v753, %v754
    %v756 = vrot.slane %v755, 1
    %v757 = vadd.f32 %v755, %v756
    %v758 = vadd.f32 %v757, 0.0
    %v759 = vmul.f32 %v727, %v727
    %760 = vadd.xlane.f32.xlu0 %v759
    %v761 = vpop.xlane.xlu0 %760
    %v762 = vrot.slane %v761, 4
    %v763 = vadd.f32 %v761, %v762
    %v764 = vrot.slane %v763, 2
    %v765 = vadd.f32 %v763, %v764
    %v766 = vrot.slane %v765, 1
    %v767 = vadd.f32 %v765, %v766
    %v768 = vadd.f32 %v767, 0.0
    %769 = vadd.xlane.f32.xlu0 %v748
    %v770 = vpop.xlane.xlu0 %769
    %v771 = vrot.slane %v770, 4
    %v772 = vadd.f32 %v770, %v771
    %v773 = vrot.slane %v772, 2
    %v774 = vadd.f32 %v772, %v773
    %v775 = vrot.slane %v774, 1
    %v776 = vadd.f32 %v774, %v775
    %v777 = vadd.f32 %v758, %v776
    %v778 = vmul.f32 %v748, %v748
    %779 = vadd.xlane.f32.xlu0 %v778
    %v780 = vpop.xlane.xlu0 %779
    %v781 = vrot.slane %v780, 4
    %v782 = vadd.f32 %v780, %v781
    %v783 = vrot.slane %v782, 2
    %v784 = vadd.f32 %v782, %v783
    %v785 = vrot.slane %v784, 1
    %v786 = vadd.f32 %v784, %v785
    %v787 = vadd.f32 %v768, %v786
    %v788 = vmul.f32 %v777, 0.00048828125
    %v789 = vmul.f32 %v787, 0.00048828125
    %v790 = vmul.f32 %v788, %v788
    %v791 = vsub.f32 %v789, %v790
    %v792 = vmax.f32 %v791, 0.0
    %s793 = sld [smem:[#allocation2 + $0x5]]
    %v794 = vadd.f32 %v792, 1e-05
    %v795 = vrsqrt.pop %v794
    %v796 = vmul.f32 %v795, %v794
    %v797 = vmul.f32 %v796, %v795
    %v798 = vmul.f32 0.5, %v797
    %v799 = vsub.f32 1.5, %v798
    %v800 = vmul.f32 %v795, %v799
    %vm801 = vweird.f32 %v794
    %vm802 = vweird.f32 %v795
    %vm803 = vmor %vm801, %vm802
    %v804 = vsel %vm803, %v795, %v800
    %v805 = vstv %s793
    %v806 = vmul.f32 %v805, %v804
    %s807 = sld [smem:[#allocation4 + $0x5]]
    %v808 = vmul.f32 %v806, %v788
    %v809 = vstv %s807
    %v810 = vsub.f32 %v809, %v808
    %v811 = vmul.f32 %v727, %v806
    %v812 = vadd.f32 %v811, %v810
    %v813 = vmax.f32 %v812, 0.0
    %s814 = scalar_lea.vmem %s4, 40
    %815 = vst [vmem:[%s814] sm:$0xff] %v813
    %v816 = vmul.f32 %v748, %v806
    %v817 = vadd.f32 %v816, %v810
    %v818 = vmax.f32 %v817, 0.0
    %s819 = scalar_lea.vmem %s4, 104
    %820 = vst [vmem:[%s819] sm:$0xff] %v818
    %v821 = vld [vmem:[%s0] sm:$0xff]
    %s822 = scalar_lea.vmem %s1, 768
    %v823 = vld [vmem:[%s822] sm:$0xff]
    %v824 = vld [vmem:[%s822 + $0x8] sm:$0xff]
    %v825 = vld [vmem:[%s822 + $0x10] sm:$0xff]
    %v826 = vld [vmem:[%s822 + $0x18] sm:$0xff]
    %v827 = vld [vmem:[%s822 + $0x20] sm:$0xff]
    %v828 = vld [vmem:[%s822 + $0x28] sm:$0xff]
    %v829 = vld [vmem:[%s822 + $0x30] sm:$0xff]
    %v830 = vld [vmem:[%s822 + $0x38] sm:$0xff]
    %v831 = vld [vmem:[%s822 + $0x40] sm:$0xff]
    %v832 = vld [vmem:[%s822 + $0x48] sm:$0xff]
    %v833 = vld [vmem:[%s822 + $0x50] sm:$0xff]
    %v834 = vld [vmem:[%s822 + $0x58] sm:$0xff]
    %v835 = vld [vmem:[%s822 + $0x60] sm:$0xff]
    %v836 = vld [vmem:[%s822 + $0x68] sm:$0xff]
    %v837 = vld [vmem:[%s822 + $0x70] sm:$0xff]
    %v838 = vld [vmem:[%s822 + $0x78] sm:$0xff]
    %839 = vmatpush.msra.mxu0 %v838
    %840 = vmatpush.msra.mxu0 %v837
    %841 = vmatpush.msra.mxu0 %v836
    %842 = vmatpush.msra.mxu0 %v835
    %843 = vmatpush.msra.mxu0 %v834
    %844 = vmatpush.msra.mxu0 %v833
    %845 = vmatpush.msra.mxu0 %v832
    %846 = vmatpush.msra.mxu0 %v831
    %847 = vmatpush.msra.mxu0 %v830
    %848 = vmatpush.msra.mxu0 %v829
    %849 = vmatpush.msra.mxu0 %v828
    %850 = vmatpush.msra.mxu0 %v827
    %851 = vmatpush.msra.mxu0 %v826
    %852 = vmatpush.msra.mxu0 %v825
    %853 = vmatpush.msra.mxu0 %v824
    %854 = vmatpush.msra.mxu0 %v823
    %855 = vmatmul.f32.gmra.mxu0 %v821
    %v856 = vpop.f32.mrf.mxu0
    %v857 = vadd.f32 0.0, %v856
    %858 = vdwg.mxu0
    %v859 = vld [vmem:[%s79] sm:$0xff]
    %860 = vmatpush.msra.mxu0 %v838
    %861 = vmatpush.msra.mxu0 %v837
    %862 = vmatpush.msra.mxu0 %v836
    %863 = vmatpush.msra.mxu0 %v835
    %864 = vmatpush.msra.mxu0 %v834
    %865 = vmatpush.msra.mxu0 %v833
    %866 = vmatpush.msra.mxu0 %v832
    %867 = vmatpush.msra.mxu0 %v831
    %868 = vmatpush.msra.mxu0 %v830
    %869 = vmatpush.msra.mxu0 %v829
    %870 = vmatpush.msra.mxu0 %v828
    %871 = vmatpush.msra.mxu0 %v827
    %872 = vmatpush.msra.mxu0 %v826
    %873 = vmatpush.msra.mxu0 %v825
    %874 = vmatpush.msra.mxu0 %v824
    %875 = vmatpush.msra.mxu0 %v823
    %876 = vmatmul.f32.gmra.mxu0 %v859
    %v877 = vpop.f32.mrf.mxu0
    %v878 = vadd.f32 0.0, %v877
    %879 = vdwg.mxu0
    %880 = vadd.xlane.f32.xlu0 %v857
    %v881 = vpop.xlane.xlu0 %880
    %v882 = vrot.slane %v881, 4
    %v883 = vadd.f32 %v881, %v882
    %v884 = vrot.slane %v883, 2
    %v885 = vadd.f32 %v883, %v884
    %v886 = vrot.slane %v885, 1
    %v887 = vadd.f32 %v885, %v886
    %v888 = vadd.f32 %v887, 0.0
    %v889 = vmul.f32 %v857, %v857
    %890 = vadd.xlane.f32.xlu0 %v889
    %v891 = vpop.xlane.xlu0 %890
    %v892 = vrot.slane %v891, 4
    %v893 = vadd.f32 %v891, %v892
    %v894 = vrot.slane %v893, 2
    %v895 = vadd.f32 %v893, %v894
    %v896 = vrot.slane %v895, 1
    %v897 = vadd.f32 %v895, %v896
    %v898 = vadd.f32 %v897, 0.0
    %899 = vadd.xlane.f32.xlu0 %v878
    %v900 = vpop.xlane.xlu0 %899
    %v901 = vrot.slane %v900, 4
    %v902 = vadd.f32 %v900, %v901
    %v903 = vrot.slane %v902, 2
    %v904 = vadd.f32 %v902, %v903
    %v905 = vrot.slane %v904, 1
    %v906 = vadd.f32 %v904, %v905
    %v907 = vadd.f32 %v888, %v906
    %v908 = vmul.f32 %v878, %v878
    %909 = vadd.xlane.f32.xlu0 %v908
    %v910 = vpop.xlane.xlu0 %909
    %v911 = vrot.slane %v910, 4
    %v912 = vadd.f32 %v910, %v911
    %v913 = vrot.slane %v912, 2
    %v914 = vadd.f32 %v912, %v913
    %v915 = vrot.slane %v914, 1
    %v916 = vadd.f32 %v914, %v915
    %v917 = vadd.f32 %v898, %v916
    %v918 = vmul.f32 %v907, 0.00048828125
    %v919 = vmul.f32 %v917, 0.00048828125
    %v920 = vmul.f32 %v918, %v918
    %v921 = vsub.f32 %v919, %v920
    %v922 = vmax.f32 %v921, 0.0
    %s923 = sld [smem:[#allocation2 + $0x6]]
    %v924 = vadd.f32 %v922, 1e-05
    %v925 = vrsqrt.pop %v924
    %v926 = vmul.f32 %v925, %v924
    %v927 = vmul.f32 %v926, %v925
    %v928 = vmul.f32 0.5, %v927
    %v929 = vsub.f32 1.5, %v928
    %v930 = vmul.f32 %v925, %v929
    %vm931 = vweird.f32 %v924
    %vm932 = vweird.f32 %v925
    %vm933 = vmor %vm931, %vm932
    %v934 = vsel %vm933, %v925, %v930
    %v935 = vstv %s923
    %v936 = vmul.f32 %v935, %v934
    %s937 = sld [smem:[#allocation4 + $0x6]]
    %v938 = vmul.f32 %v936, %v918
    %v939 = vstv %s937
    %v940 = vsub.f32 %v939, %v938
    %v941 = vmul.f32 %v857, %v936
    %v942 = vadd.f32 %v941, %v940
    %v943 = vmax.f32 %v942, 0.0
    %s944 = scalar_lea.vmem %s4, 48
    %945 = vst [vmem:[%s944] sm:$0xff] %v943
    %v946 = vmul.f32 %v878, %v936
    %v947 = vadd.f32 %v946, %v940
    %v948 = vmax.f32 %v947, 0.0
    %s949 = scalar_lea.vmem %s4, 112
    %950 = vst [vmem:[%s949] sm:$0xff] %v948
    %v951 = vld [vmem:[%s0] sm:$0xff]
    %s952 = scalar_lea.vmem %s1, 896
    %v953 = vld [vmem:[%s952] sm:$0xff]
    %v954 = vld [vmem:[%s952 + $0x8] sm:$0xff]
    %v955 = vld [vmem:[%s952 + $0x10] sm:$0xff]
    %v956 = vld [vmem:[%s952 + $0x18] sm:$0xff]
    %v957 = vld [vmem:[%s952 + $0x20] sm:$0xff]
    %v958 = vld [vmem:[%s952 + $0x28] sm:$0xff]
    %v959 = vld [vmem:[%s952 + $0x30] sm:$0xff]
    %v960 = vld [vmem:[%s952 + $0x38] sm:$0xff]
    %v961 = vld [vmem:[%s952 + $0x40] sm:$0xff]
    %v962 = vld [vmem:[%s952 + $0x48] sm:$0xff]
    %v963 = vld [vmem:[%s952 + $0x50] sm:$0xff]
    %v964 = vld [vmem:[%s952 + $0x58] sm:$0xff]
    %v965 = vld [vmem:[%s952 + $0x60] sm:$0xff]
    %v966 = vld [vmem:[%s952 + $0x68] sm:$0xff]
    %v967 = vld [vmem:[%s952 + $0x70] sm:$0xff]
    %v968 = vld [vmem:[%s952 + $0x78] sm:$0xff]
    %969 = vmatpush.msra.mxu0 %v968
    %970 = vmatpush.msra.mxu0 %v967
    %971 = vmatpush.msra.mxu0 %v966
    %972 = vmatpush.msra.mxu0 %v965
    %973 = vmatpush.msra.mxu0 %v964
    %974 = vmatpush.msra.mxu0 %v963
    %975 = vmatpush.msra.mxu0 %v962
    %976 = vmatpush.msra.mxu0 %v961
    %977 = vmatpush.msra.mxu0 %v960
    %978 = vmatpush.msra.mxu0 %v959
    %979 = vmatpush.msra.mxu0 %v958
    %980 = vmatpush.msra.mxu0 %v957
    %981 = vmatpush.msra.mxu0 %v956
    %982 = vmatpush.msra.mxu0 %v955
    %983 = vmatpush.msra.mxu0 %v954
    %984 = vmatpush.msra.mxu0 %v953
    %985 = vmatmul.f32.gmra.mxu0 %v951
    %v986 = vpop.f32.mrf.mxu0
    %v987 = vadd.f32 0.0, %v986
    %988 = vdwg.mxu0
    %v989 = vld [vmem:[%s79] sm:$0xff]
    %990 = vmatpush.msra.mxu0 %v968
    %991 = vmatpush.msra.mxu0 %v967
    %992 = vmatpush.msra.mxu0 %v966
    %993 = vmatpush.msra.mxu0 %v965
    %994 = vmatpush.msra.mxu0 %v964
    %995 = vmatpush.msra.mxu0 %v963
    %996 = vmatpush.msra.mxu0 %v962
    %997 = vmatpush.msra.mxu0 %v961
    %998 = vmatpush.msra.mxu0 %v960
    %999 = vmatpush.msra.mxu0 %v959
    %1000 = vmatpush.msra.mxu0 %v958
    %1001 = vmatpush.msra.mxu0 %v957
    %1002 = vmatpush.msra.mxu0 %v956
    %1003 = vmatpush.msra.mxu0 %v955
    %1004 = vmatpush.msra.mxu0 %v954
    %1005 = vmatpush.msra.mxu0 %v953
    %1006 = vmatmul.f32.gmra.mxu0 %v989
    %v1007 = vpop.f32.mrf.mxu0
    %v1008 = vadd.f32 0.0, %v1007
    %1009 = vdwg.mxu0
    %1010 = vadd.xlane.f32.xlu0 %v987
    %v1011 = vpop.xlane.xlu0 %1010
    %v1012 = vrot.slane %v1011, 4
    %v1013 = vadd.f32 %v1011, %v1012
    %v1014 = vrot.slane %v1013, 2
    %v1015 = vadd.f32 %v1013, %v1014
    %v1016 = vrot.slane %v1015, 1
    %v1017 = vadd.f32 %v1015, %v1016
    %v1018 = vadd.f32 %v1017, 0.0
    %v1019 = vmul.f32 %v987, %v987
    %1020 = vadd.xlane.f32.xlu0 %v1019
    %v1021 = vpop.xlane.xlu0 %1020
    %v1022 = vrot.slane %v1021, 4
    %v1023 = vadd.f32 %v1021, %v1022
    %v1024 = vrot.slane %v1023, 2
    %v1025 = vadd.f32 %v1023, %v1024
    %v1026 = vrot.slane %v1025, 1
    %v1027 = vadd.f32 %v1025, %v1026
    %v1028 = vadd.f32 %v1027, 0.0
    %1029 = vadd.xlane.f32.xlu0 %v1008
    %v1030 = vpop.xlane.xlu0 %1029
    %v1031 = vrot.slane %v1030, 4
    %v1032 = vadd.f32 %v1030, %v1031
    %v1033 = vrot.slane %v1032, 2
    %v1034 = vadd.f32 %v1032, %v1033
    %v1035 = vrot.slane %v1034, 1
    %v1036 = vadd.f32 %v1034, %v1035
    %v1037 = vadd.f32 %v1018, %v1036
    %v1038 = vmul.f32 %v1008, %v1008
    %1039 = vadd.xlane.f32.xlu0 %v1038
    %v1040 = vpop.xlane.xlu0 %1039
    %v1041 = vrot.slane %v1040, 4
    %v1042 = vadd.f32 %v1040, %v1041
    %v1043 = vrot.slane %v1042, 2
    %v1044 = vadd.f32 %v1042, %v1043
    %v1045 = vrot.slane %v1044, 1
    %v1046 = vadd.f32 %v1044, %v1045
    %v1047 = vadd.f32 %v1028, %v1046
    %v1048 = vmul.f32 %v1037, 0.00048828125
    %v1049 = vmul.f32 %v1047, 0.00048828125
    %v1050 = vmul.f32 %v1048, %v1048
    %v1051 = vsub.f32 %v1049, %v1050
    %v1052 = vmax.f32 %v1051, 0.0
    %s1053 = sld [smem:[#allocation2 + $0x7]]
    %v1054 = vadd.f32 %v1052, 1e-05
    %v1055 = vrsqrt.pop %v1054
    %v1056 = vmul.f32 %v1055, %v1054
    %v1057 = vmul.f32 %v1056, %v1055
    %v1058 = vmul.f32 0.5, %v1057
    %v1059 = vsub.f32 1.5, %v1058
    %v1060 = vmul.f32 %v1055, %v1059
    %vm1061 = vweird.f32 %v1054
    %vm1062 = vweird.f32 %v1055
    %vm1063 = vmor %vm1061, %vm1062
    %v1064 = vsel %vm1063, %v1055, %v1060
    %v1065 = vstv %s1053
    %v1066 = vmul.f32 %v1065, %v1064
    %s1067 = sld [smem:[#allocation4 + $0x7]]
    %v1068 = vmul.f32 %v1066, %v1048
    %v1069 = vstv %s1067
    %v1070 = vsub.f32 %v1069, %v1068
    %v1071 = vmul.f32 %v987, %v1066
    %v1072 = vadd.f32 %v1071, %v1070
    %v1073 = vmax.f32 %v1072, 0.0
    %s1074 = scalar_lea.vmem %s4, 56
    %1075 = vst [vmem:[%s1074] sm:$0xff] %v1073
    %v1076 = vmul.f32 %v1008, %v1066
    %v1077 = vadd.f32 %v1076, %v1070
    %v1078 = vmax.f32 %v1077, 0.0
    %s1079 = scalar_lea.vmem %s4, 120
    %1080 = vst [vmem:[%s1079] sm:$0xff] %v1078
    // Predicated region
    $region26: #{conv_transpose_bn_relu.1} parent=1 // pred_check
      _
    $region27: #{conv_transpose_bn_relu.1} parent=1 // pred_check_branch
      %1082 = sbr.rel (0) target = $region29
    $region28: #{conv_transpose_bn_relu.1} parent=1 // pred_region
      _
    $region29: #{conv_transpose_bn_relu.1} parent=1 // pred_fallthru
      _
    // Predicated region
    $region30: #{conv_transpose_bn_relu.1} parent=1 // pred_check
      _
    $region31: #{conv_transpose_bn_relu.1} parent=1 // pred_check_branch
      %1084 = sbr.rel (0) target = $region33
    $region32: #{conv_transpose_bn_relu.1} parent=1 // pred_region
      _
    $region33: #{conv_transpose_bn_relu.1} parent=1 // pred_fallthru
      _
    %1085 = vsyncpa [#allocation3], 1
    %1086 = vsyncpa [#allocation5], 1

</llo_original>
